<compile_context>
chip_gen: v5e
topology: v5e:2x2
jax: 0.10.0
libtpu: 0.0.40
codegen_flags: <defaults>
</compile_context>

<pallas_src>
import jax
import jax.numpy as jnp
from jax import lax
from jax.experimental import pallas as pl
from jax.experimental.pallas import tpu as pltpu

# ----------------------------- model config ---------------------------------
GLOBAL_LATENT_DIM = 16
LAYER_EMBED_DIM   = 8
NUM_LAYERS        = 4      # module default is 32; kept small for the demo
PROMPT_LENGTH     = 8      # multiple of 8 -> sublane-aligned prefix rows
D_MODEL           = 128    # stands in for led.config.d_model (lane-dense)
D_FF              = 256
VOCAB_SIZE        = 128    # lane-dense logits
SEQ_LEN           = 8      # decoder_input_ids length (< 1014, truncation no-op)


# ------------------------------ Pallas kernel --------------------------------
def fused_decoder_kernel(prefix_ref, emb_ref,
                         wqkv_ref, wo_ref, bo_ref,
                         wu_ref, bu_ref, wd_ref, bd_ref,
                         lm_w_ref, lm_b_ref,
                         o_ref, x_s):
    """One grid step = one batch element, ALL layers.

    prefix_ref : (L, P, D) f32   per-layer prefixes for this batch element
    emb_ref    : (S, D)    f32   token embeddings (layer-invariant)
    o_ref      : (L, S, V) f32   stacked logits for this batch element
    x_s        : (L, T, D) f32   VMEM scratch holding prefix||embeds
    """
    L, P, D = prefix_ref.shape
    S = emb_ref.shape[0]
    V = lm_w_ref.shape[1]
    T = P + S

    # Build x = concat(prefix, embeds) with two row-block stores into scratch
    # (no jnp.concatenate -> no fresh VMEM buffer / retile copy per step).
    x_s[:, :P, :] = prefix_ref[...]
    x_s[:, P:, :] = jnp.broadcast_to(emb_ref[...], (L, S, D))
    x = x_s[...]                                     # (L, T, D) f32
    x_rows = x.reshape(L * T, D)                     # leading-dim collapse (free)
    xb = x_rows.astype(jnp.bfloat16)

    # Fused QKV projection: one MXU pass with (L*T, D) LHS and (D, 3D) RHS.
    # 1/sqrt(D) softmax scale is pre-folded into the Wq slice.
    qkv = jnp.dot(xb, wqkv_ref[...], preferred_element_type=jnp.float32)  # (L*T, 3D)
    q = qkv[:, :D].reshape(L, T, D)
    k = qkv[:, D:2 * D].reshape(L, T, D)
    v = qkv[:, 2 * D:].reshape(L, T, D)

    # Per-layer causal single-head attention (batched over L).
    # attention mask is all-ones by construction -> causal mask alone suffices.
    scores = jnp.einsum('ltd,lsd->lts',
                        q.astype(jnp.bfloat16), k.astype(jnp.bfloat16),
                        preferred_element_type=jnp.float32)               # (L, T, T)
    row = lax.broadcasted_iota(jnp.int32, (T, T), 0)
    col = lax.broadcasted_iota(jnp.int32, (T, T), 1)
    scores = jnp.where((col <= row)[None, :, :], scores, jnp.float32(-1e30))

    m = jnp.max(scores, axis=-1, keepdims=True)
    p = jnp.exp(scores - m)
    denom = jnp.sum(p, axis=-1, keepdims=True)
    p = p * pl.reciprocal(denom, approx=True)        # EUP divide (free slot)

    attn = jnp.einsum('lts,lsd->ltd',
                      p.astype(jnp.bfloat16), v.astype(jnp.bfloat16),
                      preferred_element_type=jnp.float32)                 # (L, T, D)

    attn = jnp.dot(attn.reshape(L * T, D).astype(jnp.bfloat16), wo_ref[...],
                   preferred_element_type=jnp.float32) + bo_ref[...]      # (L*T, D)

    # residual + layernorm (f32 elementwise; safe on v5e too)
    h = x_rows + attn
    mu = jnp.mean(h, axis=-1, keepdims=True)
    var = jnp.mean(jnp.square(h - mu), axis=-1, keepdims=True)
    h = (h - mu) * lax.rsqrt(var + 1e-5)

    # GELU feed-forward (batched across all L*T rows)
    f = jnp.dot(h.astype(jnp.bfloat16), wu_ref[...],
                preferred_element_type=jnp.float32) + bu_ref[...]
    f = jax.nn.gelu(f)
    f = jnp.dot(f.astype(jnp.bfloat16), wd_ref[...],
                preferred_element_type=jnp.float32) + bd_ref[...]
    h = h + f
    mu = jnp.mean(h, axis=-1, keepdims=True)
    var = jnp.mean(jnp.square(h - mu), axis=-1, keepdims=True)
    h = (h - mu) * lax.rsqrt(var + 1e-5)

    # LM head only on the target rows (prefix logits are never used).
    # P is a multiple of 8 so the sublane slice is aligned (no retile).
    h_tgt = h.reshape(L, T, D)[:, P:, :].reshape(L * S, D)
    logits = jnp.dot(h_tgt.astype(jnp.bfloat16), lm_w_ref[...],
                     preferred_element_type=jnp.float32) + lm_b_ref[...]  # (L*S, V)
    o_ref[...] = logits.reshape(L, S, V)


def led_decoder_all_layers(prefixes, dec_embeds, params):
    """One pallas_call over grid=(B,); each step fuses all L layers -> (B, L, S, V)."""
    B, L, P, D = prefixes.shape
    S = dec_embeds.shape[1]
    V = params["lm_w"].shape[1]
    dff = params["wu"].shape[1]
    T = P + S
    # Constant index_map -> weight blocks stay VMEM-resident across all B steps.
    const = lambda shape: pl.BlockSpec(shape, lambda b: (0, 0))
    return pl.pallas_call(
        fused_decoder_kernel,
        out_shape=jax.ShapeDtypeStruct((B, L, S, V), jnp.float32),
        grid=(B,),
        in_specs=[
            # None (pl.Squeezed) drops the size-1 batch dim from the kernel Ref.
            pl.BlockSpec((None, L, P, D), lambda b: (b, 0, 0, 0)),   # prefixes
            pl.BlockSpec((None, S, D),    lambda b: (b, 0, 0)),      # dec_embeds
            const((D, 3 * D)),                                        # fused Wqkv
            const((D, D)), const((1, D)),                             # Wo, bo
            const((D, dff)), const((1, dff)),                         # Wu, bu
            const((dff, D)), const((1, D)),                           # Wd, bd
            const((D, V)), const((1, V)),                             # lm_w, lm_b
        ],
        out_specs=pl.BlockSpec((None, L, S, V), lambda b: (b, 0, 0, 0)),
        scratch_shapes=[pltpu.VMEM((L, T, D), jnp.float32)],
        compiler_params=pltpu.CompilerParams(
            dimension_semantics=("parallel",)),   # >=2 steps -> both v7x TCs busy
    )(prefixes, dec_embeds,
      params["wqkv"], params["wo"], params["bo"],
      params["wu"], params["bu"], params["wd"], params["bd"],
      params["lm_w"], params["lm_b"])


# ------------------------------ forward pass ---------------------------------
def hierarchical_decoder_forward(params, global_latent, decoder_input_ids=None,
                                 attention_mask=None):
    # StructureDecoder.fc — tiny GEMM, below one MXU pass: leave it to XLA.
    if global_latent.ndim == 1:
        global_latent = global_latent[None, :]
    B = global_latent.shape[0]
    layer_latents = global_latent @ params["fc_w"] + params["fc_b"]
    layer_latents = layer_latents.reshape(B, NUM_LAYERS, LAYER_EMBED_DIM)

    if decoder_input_ids is None:
        # TODO(synk): autoregressive led.generate() branch not implemented.
        raise NotImplementedError("generate() branch not implemented")

    input_ids = decoder_input_ids
    if input_ids.ndim > 2:
        input_ids = jnp.squeeze(input_ids, axis=1)
    # embedding lookup (glue) + truncation to 1014 tokens, as in the reference
    dec_embeds = jnp.take(params["embed"], input_ids, axis=0)      # (B, S, D)
    dec_embeds = dec_embeds[:, :1014, :]

    # all L prefixes in ONE GEMM: (B*L, layer_dim) @ (layer_dim, P*D)
    prefixes = (layer_latents.reshape(B * NUM_LAYERS, LAYER_EMBED_DIM)
                @ params["prefix_w"] + params["prefix_b"])
    prefixes = prefixes.reshape(B, NUM_LAYERS, PROMPT_LENGTH, D_MODEL)

    # prefix mask & target mask are both all-ones -> causal mask inside kernel
    # is exactly equivalent; no mask tensor is materialized.
    return led_decoder_all_layers(prefixes, dec_embeds, params)    # (B, L, S, V)


# ------------------------------ param init -----------------------------------
def init_params(key):
    ks = jax.random.split(key, 16)
    n = lambda k, shape, s=0.05: s * jax.random.normal(k, shape, jnp.float32)
    bf = jnp.bfloat16
    wq = n(ks[5], (D_MODEL, D_MODEL))
    wk = n(ks[6], (D_MODEL, D_MODEL))
    wv = n(ks[7], (D_MODEL, D_MODEL))
    # Fuse Q/K/V into one (D, 3D) weight; fold the 1/sqrt(D) softmax scale into Wq.
    scale = 1.0 / jnp.sqrt(jnp.float32(D_MODEL))
    wqkv = jnp.concatenate([wq * scale, wk, wv], axis=1).astype(bf)
    return {
        # StructureDecoder.fc (XLA side, f32)
        "fc_w": n(ks[0], (GLOBAL_LATENT_DIM, NUM_LAYERS * LAYER_EMBED_DIM)),
        "fc_b": n(ks[1], (NUM_LAYERS * LAYER_EMBED_DIM,)),
        # LayerDecoderLED.prefix_proj (XLA side, f32)
        "prefix_w": n(ks[2], (LAYER_EMBED_DIM, PROMPT_LENGTH * D_MODEL)),
        "prefix_b": n(ks[3], (PROMPT_LENGTH * D_MODEL,)),
        # token embeddings (resized to vocab_size)
        "embed": n(ks[4], (VOCAB_SIZE, D_MODEL), 0.1),
        # synthetic LED decoder layer (bf16 matmul weights, f32 biases as (1,N))
        "wqkv": wqkv,
        "wo": n(ks[8], (D_MODEL, D_MODEL)).astype(bf),
        "bo": n(ks[9], (1, D_MODEL)),
        "wu": n(ks[10], (D_MODEL, D_FF)).astype(bf),
        "bu": n(ks[11], (1, D_FF)),
        "wd": n(ks[12], (D_FF, D_MODEL)).astype(bf),
        "bd": n(ks[13], (1, D_MODEL)),
        # LM head
        "lm_w": n(ks[14], (D_MODEL, VOCAB_SIZE)).astype(bf),
        "lm_b": n(ks[15], (1, VOCAB_SIZE)),
    }


if __name__ == "__main__":
    B = 2
    key = jax.random.PRNGKey(0)
    kp, kx, kid = jax.random.split(key, 3)
    params = init_params(kp)
    global_latent = jax.random.normal(kx, (B, GLOBAL_LATENT_DIM), jnp.float32)
    decoder_input_ids = jax.random.randint(kid, (B, SEQ_LEN), 0, VOCAB_SIZE,
                                           dtype=jnp.int32)

    out = hierarchical_decoder_forward(params, global_latent, decoder_input_ids)
    out = jax.block_until_ready(out)
    assert out.shape == (B, NUM_LAYERS, SEQ_LEN, VOCAB_SIZE), out.shape
    assert out.dtype == jnp.float32
    assert bool(jnp.all(jnp.isfinite(out)))
    print("KERNEL_OK")
</pallas_src>

<mosaic_0001>
module attributes {stable_mosaic.version = 11 : i64} {
  func.func @fused_decoder_kernel(%arg0: i32, %arg1: memref<1x4x8x128xf32, #tpu.memory_space<vmem>>, %arg2: memref<1x8x128xf32, #tpu.memory_space<vmem>>, %arg3: memref<128x384xbf16, #tpu.memory_space<vmem>>, %arg4: memref<128x128xbf16, #tpu.memory_space<vmem>>, %arg5: memref<1x128xf32, #tpu.memory_space<vmem>>, %arg6: memref<128x256xbf16, #tpu.memory_space<vmem>>, %arg7: memref<1x256xf32, #tpu.memory_space<vmem>>, %arg8: memref<256x128xbf16, #tpu.memory_space<vmem>>, %arg9: memref<1x128xf32, #tpu.memory_space<vmem>>, %arg10: memref<128x128xbf16, #tpu.memory_space<vmem>>, %arg11: memref<1x128xf32, #tpu.memory_space<vmem>>, %arg12: memref<1x4x8x128xf32, #tpu.memory_space<vmem>>, %arg13: memref<4x16x128xf32, #tpu.memory_space<vmem>>) attributes {dimension_semantics = [#tpu.dimension_semantics<parallel>], iteration_bounds = array<i64: 2>, scalar_prefetch = 0 : i64, scratch_operands = 1 : i64, tpu.core_type = #tpu.core_type<tc>, window_params = [{transform_indices = @transform_0, window_bounds = array<i64: 1, 4, 8, 128>}, {transform_indices = @transform_1, window_bounds = array<i64: 1, 8, 128>}, {pipeline_mode = #tpu.pipeline_mode<synchronous>, transform_indices = @transform_2, window_bounds = array<i64: 128, 384>}, {pipeline_mode = #tpu.pipeline_mode<synchronous>, transform_indices = @transform_3, window_bounds = array<i64: 128, 128>}, {pipeline_mode = #tpu.pipeline_mode<synchronous>, transform_indices = @transform_4, window_bounds = array<i64: 1, 128>}, {pipeline_mode = #tpu.pipeline_mode<synchronous>, transform_indices = @transform_5, window_bounds = array<i64: 128, 256>}, {pipeline_mode = #tpu.pipeline_mode<synchronous>, transform_indices = @transform_6, window_bounds = array<i64: 1, 256>}, {pipeline_mode = #tpu.pipeline_mode<synchronous>, transform_indices = @transform_7, window_bounds = array<i64: 256, 128>}, {pipeline_mode = #tpu.pipeline_mode<synchronous>, transform_indices = @transform_8, window_bounds = array<i64: 1, 128>}, {pipeline_mode = #tpu.pipeline_mode<synchronous>, transform_indices = @transform_9, window_bounds = array<i64: 128, 128>}, {pipeline_mode = #tpu.pipeline_mode<synchronous>, transform_indices = @transform_10, window_bounds = array<i64: 1, 128>}, {transform_indices = @transform_11, window_bounds = array<i64: 1, 4, 8, 128>}]} {
    %c0 = arith.constant 0 : index
    %c0_0 = arith.constant 0 : index
    %c0_1 = arith.constant 0 : index
    %c0_2 = arith.constant 0 : index
    %0 = vector.load %arg1[%c0, %c0_0, %c0_1, %c0_2] : memref<1x4x8x128xf32, #tpu.memory_space<vmem>>, vector<1x4x8x128xf32>
    %1 = vector.shape_cast %0 : vector<1x4x8x128xf32> to vector<4x8x128xf32>
    %c0_3 = arith.constant 0 : index
    %c0_4 = arith.constant 0 : index
    %c0_5 = arith.constant 0 : index
    %2 = vector.load %arg13[%c0_3, %c0_4, %c0_5] : memref<4x16x128xf32, #tpu.memory_space<vmem>>, vector<4x8x128xf32>
    tpu.vector_store %arg13[%c0_3, %c0_4, %c0_5], %1 {strides = array<i32>} : memref<4x16x128xf32, #tpu.memory_space<vmem>>, vector<4x8x128xf32>,
    %c0_6 = arith.constant 0 : index
    %c0_7 = arith.constant 0 : index
    %c0_8 = arith.constant 0 : index
    %3 = vector.load %arg2[%c0_6, %c0_7, %c0_8] : memref<1x8x128xf32, #tpu.memory_space<vmem>>, vector<1x8x128xf32>
    %4 = vector.shape_cast %3 : vector<1x8x128xf32> to vector<8x128xf32>
    %5 = vector.shape_cast %4 : vector<8x128xf32> to vector<1x8x128xf32>
    %6 = vector.broadcast %5 : vector<1x8x128xf32> to vector<4x8x128xf32>
    %c0_9 = arith.constant 0 : index
    %c8 = arith.constant 8 : index
    %c0_10 = arith.constant 0 : index
    %7 = vector.load %arg13[%c0_9, %c8, %c0_10] : memref<4x16x128xf32, #tpu.memory_space<vmem>>, vector<4x8x128xf32>
    tpu.vector_store %arg13[%c0_9, %c8, %c0_10], %6 {strides = array<i32>} : memref<4x16x128xf32, #tpu.memory_space<vmem>>, vector<4x8x128xf32>,
    %c0_11 = arith.constant 0 : index
    %c0_12 = arith.constant 0 : index
    %c0_13 = arith.constant 0 : index
    %8 = vector.load %arg13[%c0_11, %c0_12, %c0_13] : memref<4x16x128xf32, #tpu.memory_space<vmem>>, vector<4x16x128xf32>
    %9 = vector.shape_cast %8 : vector<4x16x128xf32> to vector<64x128xf32>
    %10 = arith.truncf %9 : vector<64x128xf32> to vector<64x128xbf16>
    %c0_14 = arith.constant 0 : index
    %c0_15 = arith.constant 0 : index
    %11 = vector.load %arg3[%c0_14, %c0_15] : memref<128x384xbf16, #tpu.memory_space<vmem>>, vector<128x384xbf16>
    %cst = arith.constant dense<0.000000e+00> : vector<64x384xf32>
    %12 = tpu.matmul %10, %11, %cst {dimension_numbers = #tpu.dot_dimension_numbers<[1], [0], [0], [1], [0, 0, 1, 1], [], []>} : vector<64x128xbf16>, vector<128x384xbf16>, vector<64x384xf32> -> vector<64x384xf32>
    %13 = vector.extract_strided_slice %12 {offsets = [0, 0], sizes = [64, 128], strides = [1, 1]} : vector<64x384xf32> to vector<64x128xf32>
    %14 = vector.shape_cast %13 : vector<64x128xf32> to vector<4x16x128xf32>
    %15 = vector.extract_strided_slice %12 {offsets = [0, 128], sizes = [64, 128], strides = [1, 1]} : vector<64x384xf32> to vector<64x128xf32>
    %16 = vector.shape_cast %15 : vector<64x128xf32> to vector<4x16x128xf32>
    %17 = vector.extract_strided_slice %12 {offsets = [0, 256], sizes = [64, 128], strides = [1, 1]} : vector<64x384xf32> to vector<64x128xf32>
    %18 = vector.shape_cast %17 : vector<64x128xf32> to vector<4x16x128xf32>
    %19 = arith.truncf %14 : vector<4x16x128xf32> to vector<4x16x128xbf16>
    %20 = arith.truncf %16 : vector<4x16x128xf32> to vector<4x16x128xbf16>
    "tpu.trace_start"() <{level = 10 : i32, message = "ltd,lsd->lts"}> : () -> ()
    %cst_16 = arith.constant dense<0.000000e+00> : vector<4x16x16xf32>
    %21 = tpu.matmul %19, %20, %cst_16 {dimension_numbers = #tpu.dot_dimension_numbers<[2], [2], [1], [1], [0, 0, 0, 1, 1, 1], [0], [0]>} : vector<4x16x128xbf16>, vector<4x16x128xbf16>, vector<4x16x16xf32> -> vector<4x16x16xf32>
    "tpu.trace_stop"() : () -> ()
    %22 = tpu.iota {dimensions = array<i32: 0>} : vector<16x16xi32>
    %23 = tpu.iota {dimensions = array<i32: 1>} : vector<16x16xi32>
    %24 = arith.cmpi sle, %23, %22 : vector<16x16xi32>
    %25 = vector.shape_cast %24 : vector<16x16xi1> to vector<1x16x16xi1>
    %cst_17 = arith.constant -1.000000e+30 : f32
    %26 = vector.shape_cast %25 : vector<1x16x16xi1> to vector<1x16x16xi1>
    %27 = vector.broadcast %26 : vector<1x16x16xi1> to vector<4x16x16xi1>
    %28 = vector.broadcast %cst_17 : f32 to vector<4x16x16xf32>
    %29 = arith.select %27, %21, %28 : vector<4x16x16xi1>, vector<4x16x16xf32>
    %cst_18 = arith.constant dense<0xFF800000> : vector<4x16xf32>
    %30 = vector.multi_reduction <maximumf>, %29, %cst_18 [2] : vector<4x16x16xf32> to vector<4x16xf32>
    %31 = vector.shape_cast %30 : vector<4x16xf32> to vector<4x16x1xf32>
    %32 = vector.broadcast %31 : vector<4x16x1xf32> to vector<4x16x16xf32>
    %33 = arith.subf %29, %32 : vector<4x16x16xf32>
    %34 = math.exp %33 : vector<4x16x16xf32>
    %cst_19 = arith.constant dense<0.000000e+00> : vector<4x16xf32>
    %35 = vector.multi_reduction <add>, %34, %cst_19 [2] : vector<4x16x16xf32> to vector<4x16xf32>
    %36 = vector.shape_cast %35 : vector<4x16xf32> to vector<4x16x1xf32>
    %37 = tpu.reciprocal %36 {approx = true} : vector<4x16x1xf32> -> vector<4x16x1xf32>
    %38 = vector.broadcast %37 : vector<4x16x1xf32> to vector<4x16x16xf32>
    %39 = arith.mulf %34, %38 : vector<4x16x16xf32>
    %40 = arith.truncf %39 : vector<4x16x16xf32> to vector<4x16x16xbf16>
    %41 = arith.truncf %18 : vector<4x16x128xf32> to vector<4x16x128xbf16>
    "tpu.trace_start"() <{level = 10 : i32, message = "lts,lsd->ltd"}> : () -> ()
    %cst_20 = arith.constant dense<0.000000e+00> : vector<4x16x128xf32>
    %42 = tpu.matmul %40, %41, %cst_20 {dimension_numbers = #tpu.dot_dimension_numbers<[2], [1], [1], [2], [0, 0, 0, 1, 1, 2], [0], [0]>} : vector<4x16x16xbf16>, vector<4x16x128xbf16>, vector<4x16x128xf32> -> vector<4x16x128xf32>
    "tpu.trace_stop"() : () -> ()
    %43 = vector.shape_cast %42 : vector<4x16x128xf32> to vector<64x128xf32>
    %44 = arith.truncf %43 : vector<64x128xf32> to vector<64x128xbf16>
    %c0_21 = arith.constant 0 : index
    %c0_22 = arith.constant 0 : index
    %45 = vector.load %arg4[%c0_21, %c0_22] : memref<128x128xbf16, #tpu.memory_space<vmem>>, vector<128x128xbf16>
    %cst_23 = arith.constant dense<0.000000e+00> : vector<64x128xf32>
    %46 = tpu.matmul %44, %45, %cst_23 {dimension_numbers = #tpu.dot_dimension_numbers<[1], [0], [0], [1], [0, 0, 1, 1], [], []>} : vector<64x128xbf16>, vector<128x128xbf16>, vector<64x128xf32> -> vector<64x128xf32>
    %c0_24 = arith.constant 0 : index
    %c0_25 = arith.constant 0 : index
    %47 = vector.load %arg5[%c0_24, %c0_25] : memref<1x128xf32, #tpu.memory_space<vmem>>, vector<1x128xf32>
    %48 = vector.broadcast %47 : vector<1x128xf32> to vector<64x128xf32>
    %49 = arith.addf %46, %48 : vector<64x128xf32>
    %50 = arith.addf %9, %49 : vector<64x128xf32>
    %cst_26 = arith.constant dense<0.000000e+00> : vector<64xf32>
    %51 = vector.multi_reduction <add>, %50, %cst_26 [1] : vector<64x128xf32> to vector<64xf32>
    %52 = vector.shape_cast %51 : vector<64xf32> to vector<64x1xf32>
    %cst_27 = arith.constant 1.280000e+02 : f32
    %53 = vector.broadcast %cst_27 : f32 to vector<64x1xf32>
    %54 = arith.divf %52, %53 : vector<64x1xf32>
    %55 = vector.broadcast %54 : vector<64x1xf32> to vector<64x128xf32>
    %56 = arith.subf %50, %55 : vector<64x128xf32>
    %57 = arith.mulf %56, %56 : vector<64x128xf32>
    %cst_28 = arith.constant dense<0.000000e+00> : vector<64xf32>
    %58 = vector.multi_reduction <add>, %57, %cst_28 [1] : vector<64x128xf32> to vector<64xf32>
    %59 = vector.shape_cast %58 : vector<64xf32> to vector<64x1xf32>
    %cst_29 = arith.constant 1.280000e+02 : f32
    %60 = vector.broadcast %cst_29 : f32 to vector<64x1xf32>
    %61 = arith.divf %59, %60 : vector<64x1xf32>
    %62 = vector.broadcast %54 : vector<64x1xf32> to vector<64x128xf32>
    %63 = arith.subf %50, %62 : vector<64x128xf32>
    %cst_30 = arith.constant 9.99999974E-6 : f32
    %64 = vector.broadcast %cst_30 : f32 to vector<64x1xf32>
    %65 = arith.addf %61, %64 : vector<64x1xf32>
    %66 = math.rsqrt %65 : vector<64x1xf32>
    %67 = vector.broadcast %66 : vector<64x1xf32> to vector<64x128xf32>
    %68 = arith.mulf %63, %67 : vector<64x128xf32>
    %69 = arith.truncf %68 : vector<64x128xf32> to vector<64x128xbf16>
    %c0_31 = arith.constant 0 : index
    %c0_32 = arith.constant 0 : index
    %70 = vector.load %arg6[%c0_31, %c0_32] : memref<128x256xbf16, #tpu.memory_space<vmem>>, vector<128x256xbf16>
    %cst_33 = arith.constant dense<0.000000e+00> : vector<64x256xf32>
    %71 = tpu.matmul %69, %70, %cst_33 {dimension_numbers = #tpu.dot_dimension_numbers<[1], [0], [0], [1], [0, 0, 1, 1], [], []>} : vector<64x128xbf16>, vector<128x256xbf16>, vector<64x256xf32> -> vector<64x256xf32>
    %c0_34 = arith.constant 0 : index
    %c0_35 = arith.constant 0 : index
    %72 = vector.load %arg7[%c0_34, %c0_35] : memref<1x256xf32, #tpu.memory_space<vmem>>, vector<1x256xf32>
    %73 = vector.broadcast %72 : vector<1x256xf32> to vector<64x256xf32>
    %74 = arith.addf %71, %73 : vector<64x256xf32>
    %75 = arith.mulf %74, %74 : vector<64x256xf32>
    %76 = arith.mulf %74, %75 : vector<64x256xf32>
    %cst_36 = arith.constant 4.471500e-02 : f32
    %77 = vector.broadcast %cst_36 : f32 to vector<64x256xf32>
    %78 = arith.mulf %77, %76 : vector<64x256xf32>
    %79 = arith.addf %74, %78 : vector<64x256xf32>
    %cst_37 = arith.constant 0.797884583 : f32
    %80 = vector.broadcast %cst_37 : f32 to vector<64x256xf32>
    %81 = arith.mulf %80, %79 : vector<64x256xf32>
    %82 = math.tanh %81 : vector<64x256xf32>
    %cst_38 = arith.constant 1.000000e+00 : f32
    %83 = vector.broadcast %cst_38 : f32 to vector<64x256xf32>
    %84 = arith.addf %83, %82 : vector<64x256xf32>
    %cst_39 = arith.constant 5.000000e-01 : f32
    %85 = vector.broadcast %cst_39 : f32 to vector<64x256xf32>
    %86 = arith.mulf %85, %84 : vector<64x256xf32>
    %87 = arith.mulf %74, %86 : vector<64x256xf32>
    %88 = arith.truncf %87 : vector<64x256xf32> to vector<64x256xbf16>
    %c0_40 = arith.constant 0 : index
    %c0_41 = arith.constant 0 : index
    %89 = vector.load %arg8[%c0_40, %c0_41] : memref<256x128xbf16, #tpu.memory_space<vmem>>, vector<256x128xbf16>
    %cst_42 = arith.constant dense<0.000000e+00> : vector<64x128xf32>
    %90 = tpu.matmul %88, %89, %cst_42 {dimension_numbers = #tpu.dot_dimension_numbers<[1], [0], [0], [1], [0, 0, 1, 1], [], []>} : vector<64x256xbf16>, vector<256x128xbf16>, vector<64x128xf32> -> vector<64x128xf32>
    %c0_43 = arith.constant 0 : index
    %c0_44 = arith.constant 0 : index
    %91 = vector.load %arg9[%c0_43, %c0_44] : memref<1x128xf32, #tpu.memory_space<vmem>>, vector<1x128xf32>
    %92 = vector.broadcast %91 : vector<1x128xf32> to vector<64x128xf32>
    %93 = arith.addf %90, %92 : vector<64x128xf32>
    %94 = arith.addf %68, %93 : vector<64x128xf32>
    %cst_45 = arith.constant dense<0.000000e+00> : vector<64xf32>
    %95 = vector.multi_reduction <add>, %94, %cst_45 [1] : vector<64x128xf32> to vector<64xf32>
    %96 = vector.shape_cast %95 : vector<64xf32> to vector<64x1xf32>
    %cst_46 = arith.constant 1.280000e+02 : f32
    %97 = vector.broadcast %cst_46 : f32 to vector<64x1xf32>
    %98 = arith.divf %96, %97 : vector<64x1xf32>
    %99 = vector.broadcast %98 : vector<64x1xf32> to vector<64x128xf32>
    %100 = arith.subf %94, %99 : vector<64x128xf32>
    %101 = arith.mulf %100, %100 : vector<64x128xf32>
    %cst_47 = arith.constant dense<0.000000e+00> : vector<64xf32>
    %102 = vector.multi_reduction <add>, %101, %cst_47 [1] : vector<64x128xf32> to vector<64xf32>
    %103 = vector.shape_cast %102 : vector<64xf32> to vector<64x1xf32>
    %cst_48 = arith.constant 1.280000e+02 : f32
    %104 = vector.broadcast %cst_48 : f32 to vector<64x1xf32>
    %105 = arith.divf %103, %104 : vector<64x1xf32>
    %106 = vector.broadcast %98 : vector<64x1xf32> to vector<64x128xf32>
    %107 = arith.subf %94, %106 : vector<64x128xf32>
    %cst_49 = arith.constant 9.99999974E-6 : f32
    %108 = vector.broadcast %cst_49 : f32 to vector<64x1xf32>
    %109 = arith.addf %105, %108 : vector<64x1xf32>
    %110 = math.rsqrt %109 : vector<64x1xf32>
    %111 = vector.broadcast %110 : vector<64x1xf32> to vector<64x128xf32>
    %112 = arith.mulf %107, %111 : vector<64x128xf32>
    %113 = vector.shape_cast %112 : vector<64x128xf32> to vector<4x16x128xf32>
    %114 = vector.extract_strided_slice %113 {offsets = [0, 8, 0], sizes = [4, 8, 128], strides = [1, 1, 1]} : vector<4x16x128xf32> to vector<4x8x128xf32>
    %115 = vector.shape_cast %114 : vector<4x8x128xf32> to vector<32x128xf32>
    %116 = arith.truncf %115 : vector<32x128xf32> to vector<32x128xbf16>
    %c0_50 = arith.constant 0 : index
    %c0_51 = arith.constant 0 : index
    %117 = vector.load %arg10[%c0_50, %c0_51] : memref<128x128xbf16, #tpu.memory_space<vmem>>, vector<128x128xbf16>
    %cst_52 = arith.constant dense<0.000000e+00> : vector<32x128xf32>
    %118 = tpu.matmul %116, %117, %cst_52 {dimension_numbers = #tpu.dot_dimension_numbers<[1], [0], [0], [1], [0, 0, 1, 1], [], []>} : vector<32x128xbf16>, vector<128x128xbf16>, vector<32x128xf32> -> vector<32x128xf32>
    %c0_53 = arith.constant 0 : index
    %c0_54 = arith.constant 0 : index
    %119 = vector.load %arg11[%c0_53, %c0_54] : memref<1x128xf32, #tpu.memory_space<vmem>>, vector<1x128xf32>
    %120 = vector.broadcast %119 : vector<1x128xf32> to vector<32x128xf32>
    %121 = arith.addf %118, %120 : vector<32x128xf32>
    %122 = vector.shape_cast %121 : vector<32x128xf32> to vector<4x8x128xf32>
    %c0_55 = arith.constant 0 : index
    %c0_56 = arith.constant 0 : index
    %c0_57 = arith.constant 0 : index
    %c0_58 = arith.constant 0 : index
    %123 = vector.load %arg12[%c0_55, %c0_56, %c0_57, %c0_58] : memref<1x4x8x128xf32, #tpu.memory_space<vmem>>, vector<1x4x8x128xf32>
    %124 = vector.shape_cast %123 : vector<1x4x8x128xf32> to vector<4x8x128xf32>
    %125 = vector.shape_cast %122 : vector<4x8x128xf32> to vector<1x4x8x128xf32>
    tpu.vector_store %arg12[%c0_55, %c0_56, %c0_57, %c0_58], %125 {strides = array<i32>} : memref<1x4x8x128xf32, #tpu.memory_space<vmem>>, vector<1x4x8x128xf32>,
    return
  }
  func.func @transform_0(%arg0: i32) -> (i32, i32, i32, i32) {
    %c0_i32 = arith.constant 0 : i32
    %c0_i32_0 = arith.constant 0 : i32
    %c0_i32_1 = arith.constant 0 : i32
    %c0_i32_2 = arith.constant 0 : i32
    return %arg0, %c0_i32, %c0_i32_0, %c0_i32_1 : i32, i32, i32, i32
  }
  func.func @transform_1(%arg0: i32) -> (i32, i32, i32) {
    %c0_i32 = arith.constant 0 : i32
    %c0_i32_0 = arith.constant 0 : i32
    %c0_i32_1 = arith.constant 0 : i32
    return %arg0, %c0_i32, %c0_i32_0 : i32, i32, i32
  }
  func.func @transform_2(%arg0: i32) -> (i32, i32) {
    %c0_i32 = arith.constant 0 : i32
    %c0_i32_0 = arith.constant 0 : i32
    %c0_i32_1 = arith.constant 0 : i32
    return %c0_i32, %c0_i32_0 : i32, i32
  }
  func.func @transform_3(%arg0: i32) -> (i32, i32) {
    %c0_i32 = arith.constant 0 : i32
    %c0_i32_0 = arith.constant 0 : i32
    %c0_i32_1 = arith.constant 0 : i32
    return %c0_i32, %c0_i32_0 : i32, i32
  }
  func.func @transform_4(%arg0: i32) -> (i32, i32) {
    %c0_i32 = arith.constant 0 : i32
    %c0_i32_0 = arith.constant 0 : i32
    %c0_i32_1 = arith.constant 0 : i32
    return %c0_i32, %c0_i32_0 : i32, i32
  }
  func.func @transform_5(%arg0: i32) -> (i32, i32) {
    %c0_i32 = arith.constant 0 : i32
    %c0_i32_0 = arith.constant 0 : i32
    %c0_i32_1 = arith.constant 0 : i32
    return %c0_i32, %c0_i32_0 : i32, i32
  }
  func.func @transform_6(%arg0: i32) -> (i32, i32) {
    %c0_i32 = arith.constant 0 : i32
    %c0_i32_0 = arith.constant 0 : i32
    %c0_i32_1 = arith.constant 0 : i32
    return %c0_i32, %c0_i32_0 : i32, i32
  }
  func.func @transform_7(%arg0: i32) -> (i32, i32) {
    %c0_i32 = arith.constant 0 : i32
    %c0_i32_0 = arith.constant 0 : i32
    %c0_i32_1 = arith.constant 0 : i32
    return %c0_i32, %c0_i32_0 : i32, i32
  }
  func.func @transform_8(%arg0: i32) -> (i32, i32) {
    %c0_i32 = arith.constant 0 : i32
    %c0_i32_0 = arith.constant 0 : i32
    %c0_i32_1 = arith.constant 0 : i32
    return %c0_i32, %c0_i32_0 : i32, i32
  }
  func.func @transform_9(%arg0: i32) -> (i32, i32) {
    %c0_i32 = arith.constant 0 : i32
    %c0_i32_0 = arith.constant 0 : i32
    %c0_i32_1 = arith.constant 0 : i32
    return %c0_i32, %c0_i32_0 : i32, i32
  }
  func.func @transform_10(%arg0: i32) -> (i32, i32) {
    %c0_i32 = arith.constant 0 : i32
    %c0_i32_0 = arith.constant 0 : i32
    %c0_i32_1 = arith.constant 0 : i32
    return %c0_i32, %c0_i32_0 : i32, i32
  }
  func.func @transform_11(%arg0: i32) -> (i32, i32, i32, i32) {
    %c0_i32 = arith.constant 0 : i32
    %c0_i32_0 = arith.constant 0 : i32
    %c0_i32_1 = arith.constant 0 : i32
    %c0_i32_2 = arith.constant 0 : i32
    return %arg0, %c0_i32, %c0_i32_0, %c0_i32_1 : i32, i32, i32, i32
  }
}

</mosaic_0001>

<llo_original>
// kernel: tpu_custom_call.1
$region0: #{tpu_custom_call.1}
  #allocation0 [shape = 'u32[]', space=smem, size = 0x4, offset = 0x4, fixed_abs, tag = 'smem constant byte address 0x4 - core index']
  #allocation1 [shape = 'u32[72,128]{1,0:T(1,128)}', space=vmem, size = 0x9000, scoped, tag = 'internal scratch']
  #allocation2 [shape = 'f32[4,16,128]{2,1,0:T(8,128)}', space=vmem, size = 0x8000, scoped, tag = 'scratch operand']
  %s0 = inlined_call_operand.hbm [shape: f32[2,4,8,128], index: 0, kind: input, shape index: {}]
  %s1 = inlined_call_operand.hbm [shape: f32[2,8,128], index: 1, kind: input, shape index: {}]
  %s2 = inlined_call_operand.hbm [shape: bf16[128,384], index: 2, kind: input, shape index: {}]
  %s3 = inlined_call_operand.hbm [shape: bf16[128,128], index: 3, kind: input, shape index: {}]
  %s4 = inlined_call_operand.vmem [shape: f32[1,128], index: 4, kind: input, shape index: {}]
  %s5 = inlined_call_operand.hbm [shape: bf16[128,256], index: 5, kind: input, shape index: {}]
  %s6 = inlined_call_operand.vmem [shape: f32[1,256], index: 6, kind: input, shape index: {}]
  %s7 = inlined_call_operand.hbm [shape: bf16[256,128], index: 7, kind: input, shape index: {}]
  %s8 = inlined_call_operand.vmem [shape: f32[1,128], index: 8, kind: input, shape index: {}]
  %s9 = inlined_call_operand.hbm [shape: bf16[128,128], index: 9, kind: input, shape index: {}]
  %s10 = inlined_call_operand.vmem [shape: f32[1,128], index: 10, kind: input, shape index: {}]
  %s11 = inlined_call_operand.hbm [shape: f32[2,4,8,128], index: 11, kind: output, shape index: {}]
  %s12 = sld [smem:[#allocation0]]
  $region105: #{tpu_custom_call.1} parent=0
    _
  %s14 = ssub.s32 1, %s12
  %s15 = scalar_select 0, %s14, %s12
  $region1: #{tpu_custom_call.1} parent=0
    #allocation3 [shape = 'u8[32768]{0}', space=vmem, size = 0x8000, scoped, tag = 'input window, operand 0']
    #allocation4 [shape = 's32[2]{0}', space=sflag, size = 0x8, scoped, tag = 'scoped memory for tpu_custom_call.1']
    #allocation5 [shape = 's32[2]{0}', space=sflag, size = 0x8, scoped, tag = 'scoped memory for tpu_custom_call.1']
    #allocation6 [shape = 'u8[8192]{0}', space=vmem, size = 0x2000, scoped, tag = 'input window, operand 1']
    #allocation7 [shape = 's32[2]{0}', space=sflag, size = 0x8, scoped, tag = 'scoped memory for tpu_custom_call.1']
    #allocation8 [shape = 'u8[98304]{0}', space=vmem, size = 0x18000, scoped, tag = 'input window, operand 2, single buffered']
    #allocation9 [shape = 'u8[32768]{0}', space=vmem, size = 0x8000, scoped, tag = 'input window, operand 3, single buffered']
    #allocation10 [shape = 's32[1]{0}', space=sflag, size = 0x4, scoped, tag = 'scoped memory for tpu_custom_call.1']
    #allocation11 [shape = 'u8[65536]{0}', space=vmem, size = 0x10000, scoped, tag = 'input window, operand 5, single buffered']
    #allocation12 [shape = 'u8[65536]{0}', space=vmem, size = 0x10000, scoped, tag = 'input window, operand 7, single buffered']
    #allocation13 [shape = 's32[1]{0}', space=sflag, size = 0x4, scoped, tag = 'scoped memory for tpu_custom_call.1']
    #allocation14 [shape = 'u8[32768]{0}', space=vmem, size = 0x8000, scoped, tag = 'input window, operand 9, single buffered']
    #allocation15 [shape = 'u8[32768]{0}', space=vmem, size = 0x8000, scoped, tag = 'output window, operand 0']
    %16 = vsyncpa [#allocation4], 0
    %s17 = scalar_lea.sflag [#allocation4], 1
    %18 = vsyncpa %s17, 0
    %19 = vsyncpa [#allocation7], 0
    %s20 = scalar_lea.sflag [#allocation7], 1
    %21 = vsyncpa %s20, 0
    %22 = vsyncpa [#allocation10], 0
    %23 = vsyncpa [#allocation13], 0
    %24 = vsyncpa [#allocation5], 0
    %s25 = scalar_lea.sflag [#allocation5], 1
    %26 = vsyncpa %s25, 0
    loop: start=0, step=1, limit=4
    $region2: #{tpu_custom_call.1} parent=1 // loop_pre_header
      _
    $region3: #{tpu_custom_call.1} parent=1 // loop_header
      %s28 = sphi 0, %s32
      %p29 = scmp.ge.s32.totalorder %s28, 4
      %s38 = sphi 0, %s40
      %s41 = sphi 0, %s38
      %s42 = sphi 0, %s41
      %s58 = sphi 0, %s42
      %s64 = sphi 0, %s66
      %s67 = sphi 0, %s64
      %s68 = sphi 0, %s67
      %s84 = sphi 0, %s68
      %s88 = sphi 0, %s88
      %s90 = sphi 0, %s88
      %s91 = sphi 0, %s90
      %s105 = sphi 0, %s91
      %s109 = sphi 0, %s109
      %s111 = sphi 0, %s109
      %s112 = sphi 0, %s111
      %s126 = sphi 0, %s112
      %s130 = sphi 0, %s130
      %s132 = sphi 0, %s130
      %s133 = sphi 0, %s132
      %s147 = sphi 0, %s133
      %s151 = sphi 0, %s151
      %s153 = sphi 0, %s151
      %s154 = sphi 0, %s153
      %s168 = sphi 0, %s154
      %s172 = sphi 0, %s172
      %s174 = sphi 0, %s172
      %s175 = sphi 0, %s174
      %s189 = sphi 0, %s175
      %s193 = sphi 0, %s193
      %s195 = sphi 0, %s193
      %s196 = sphi 0, %s195
      %s210 = sphi 0, %s196
      %s214 = sphi 0, %s214
      %s216 = sphi 0, %s214
      %s217 = sphi 0, %s216
      %s231 = sphi 0, %s217
      %s235 = sphi 0, %s235
      %s237 = sphi 0, %s235
      %s238 = sphi 0, %s237
      %s252 = sphi 0, %s238
      %s256 = sphi 0, %s256
      %s258 = sphi 0, %s256
      %s259 = sphi 0, %s258
      %s273 = sphi 0, %s259
      %s279 = sphi 0, %s281
      %s282 = sphi 0, %s279
      %s283 = sphi 0, %s282
      %s299 = sphi 0, %s283
    $region4: #{tpu_custom_call.1} parent=1 // loop_header_branch
      %31 = sbr.rel (%p29) target = $region8
    $region5: #{tpu_custom_call.1} parent=1 // loop_body
      %s33 = ssub.s32 %s28, 1
      %s34 = ssub.s32 %s28, 2
      %s35 = sadd.s32 %s28, 1
      %s36 = ssub.s32 %s28, %s35
      %p37 = scmp.eq.s32.totalorder %s36, 0
      %s39 = sadd.s32 %s38, 1
      %s40 = scalar_select %p37, %s38, %s39
      %p43 = pneg %p37
      %p44 = scmp.eq.s32.totalorder %s28, 1
      %p45 = por %p43, %p44
      %p46 = scmp.ne.s32.totalorder %s38, %s41
      %p47 = scmp.eq.s32.totalorder %s28, 0
      %p48 = por %p46, %p47
      %p49 = scmp.ne.s32.totalorder %s38, %s41
      %p50 = scmp.eq.s32.totalorder %s33, 1
      %p51 = por %p49, %p50
      %p52 = scmp.ne.s32.totalorder %s41, %s42
      %p53 = scmp.eq.s32.totalorder %s33, 0
      %p54 = por %p52, %p53
      %p55 = scmp.ne.s32.totalorder %s41, %s42
      %p56 = scmp.eq.s32.totalorder %s34, 1
      %p57 = por %p55, %p56
      %p59 = scmp.ne.s32.totalorder %s42, %s58
      %p60 = scmp.eq.s32.totalorder %s34, 0
      %p61 = por %p59, %p60
      %s62 = ssub.s32 %s28, %s35
      %p63 = scmp.eq.s32.totalorder %s62, 0
      %s65 = sadd.s32 %s64, 1
      %s66 = scalar_select %p63, %s64, %s65
      %p69 = pneg %p63
      %p70 = scmp.eq.s32.totalorder %s28, 1
      %p71 = por %p69, %p70
      %p72 = scmp.ne.s32.totalorder %s64, %s67
      %p73 = scmp.eq.s32.totalorder %s28, 0
      %p74 = por %p72, %p73
      %p75 = scmp.ne.s32.totalorder %s64, %s67
      %p76 = scmp.eq.s32.totalorder %s33, 1
      %p77 = por %p75, %p76
      %p78 = scmp.ne.s32.totalorder %s67, %s68
      %p79 = scmp.eq.s32.totalorder %s33, 0
      %p80 = por %p78, %p79
      %p81 = scmp.ne.s32.totalorder %s67, %s68
      %p82 = scmp.eq.s32.totalorder %s34, 1
      %p83 = por %p81, %p82
      %p85 = scmp.ne.s32.totalorder %s68, %s84
      %p86 = scmp.eq.s32.totalorder %s34, 0
      %p87 = por %p85, %p86
      %s89 = sadd.s32 %s88, 1
      %p92 = scmp.eq.s32.totalorder %s28, 1
      %p93 = scmp.ne.s32.totalorder %s88, %s90
      %p94 = scmp.eq.s32.totalorder %s28, 0
      %p95 = por %p93, %p94
      %p96 = scmp.ne.s32.totalorder %s88, %s90
      %p97 = scmp.eq.s32.totalorder %s33, 1
      %p98 = por %p96, %p97
      %p99 = scmp.ne.s32.totalorder %s90, %s91
      %p100 = scmp.eq.s32.totalorder %s33, 0
      %p101 = por %p99, %p100
      %p102 = scmp.ne.s32.totalorder %s90, %s91
      %p103 = scmp.eq.s32.totalorder %s34, 1
      %p104 = por %p102, %p103
      %p106 = scmp.ne.s32.totalorder %s91, %s105
      %p107 = scmp.eq.s32.totalorder %s34, 0
      %p108 = por %p106, %p107
      %s110 = sadd.s32 %s109, 1
      %p113 = scmp.eq.s32.totalorder %s28, 1
      %p114 = scmp.ne.s32.totalorder %s109, %s111
      %p115 = scmp.eq.s32.totalorder %s28, 0
      %p116 = por %p114, %p115
      %p117 = scmp.ne.s32.totalorder %s109, %s111
      %p118 = scmp.eq.s32.totalorder %s33, 1
      %p119 = por %p117, %p118
      %p120 = scmp.ne.s32.totalorder %s111, %s112
      %p121 = scmp.eq.s32.totalorder %s33, 0
      %p122 = por %p120, %p121
      %p123 = scmp.ne.s32.totalorder %s111, %s112
      %p124 = scmp.eq.s32.totalorder %s34, 1
      %p125 = por %p123, %p124
      %p127 = scmp.ne.s32.totalorder %s112, %s126
      %p128 = scmp.eq.s32.totalorder %s34, 0
      %p129 = por %p127, %p128
      %s131 = sadd.s32 %s130, 1
      %p134 = scmp.eq.s32.totalorder %s28, 1
      %p135 = scmp.ne.s32.totalorder %s130, %s132
      %p136 = scmp.eq.s32.totalorder %s28, 0
      %p137 = por %p135, %p136
      %p138 = scmp.ne.s32.totalorder %s130, %s132
      %p139 = scmp.eq.s32.totalorder %s33, 1
      %p140 = por %p138, %p139
      %p141 = scmp.ne.s32.totalorder %s132, %s133
      %p142 = scmp.eq.s32.totalorder %s33, 0
      %p143 = por %p141, %p142
      %p144 = scmp.ne.s32.totalorder %s132, %s133
      %p145 = scmp.eq.s32.totalorder %s34, 1
      %p146 = por %p144, %p145
      %p148 = scmp.ne.s32.totalorder %s133, %s147
      %p149 = scmp.eq.s32.totalorder %s34, 0
      %p150 = por %p148, %p149
      %s152 = sadd.s32 %s151, 1
      %p155 = scmp.eq.s32.totalorder %s28, 1
      %p156 = scmp.ne.s32.totalorder %s151, %s153
      %p157 = scmp.eq.s32.totalorder %s28, 0
      %p158 = por %p156, %p157
      %p159 = scmp.ne.s32.totalorder %s151, %s153
      %p160 = scmp.eq.s32.totalorder %s33, 1
      %p161 = por %p159, %p160
      %p162 = scmp.ne.s32.totalorder %s153, %s154
      %p163 = scmp.eq.s32.totalorder %s33, 0
      %p164 = por %p162, %p163
      %p165 = scmp.ne.s32.totalorder %s153, %s154
      %p166 = scmp.eq.s32.totalorder %s34, 1
      %p167 = por %p165, %p166
      %p169 = scmp.ne.s32.totalorder %s154, %s168
      %p170 = scmp.eq.s32.totalorder %s34, 0
      %p171 = por %p169, %p170
      %s173 = sadd.s32 %s172, 1
      %p176 = scmp.eq.s32.totalorder %s28, 1
      %p177 = scmp.ne.s32.totalorder %s172, %s174
      %p178 = scmp.eq.s32.totalorder %s28, 0
      %p179 = por %p177, %p178
      %p180 = scmp.ne.s32.totalorder %s172, %s174
      %p181 = scmp.eq.s32.totalorder %s33, 1
      %p182 = por %p180, %p181
      %p183 = scmp.ne.s32.totalorder %s174, %s175
      %p184 = scmp.eq.s32.totalorder %s33, 0
      %p185 = por %p183, %p184
      %p186 = scmp.ne.s32.totalorder %s174, %s175
      %p187 = scmp.eq.s32.totalorder %s34, 1
      %p188 = por %p186, %p187
      %p190 = scmp.ne.s32.totalorder %s175, %s189
      %p191 = scmp.eq.s32.totalorder %s34, 0
      %p192 = por %p190, %p191
      %s194 = sadd.s32 %s193, 1
      %p197 = scmp.eq.s32.totalorder %s28, 1
      %p198 = scmp.ne.s32.totalorder %s193, %s195
      %p199 = scmp.eq.s32.totalorder %s28, 0
      %p200 = por %p198, %p199
      %p201 = scmp.ne.s32.totalorder %s193, %s195
      %p202 = scmp.eq.s32.totalorder %s33, 1
      %p203 = por %p201, %p202
      %p204 = scmp.ne.s32.totalorder %s195, %s196
      %p205 = scmp.eq.s32.totalorder %s33, 0
      %p206 = por %p204, %p205
      %p207 = scmp.ne.s32.totalorder %s195, %s196
      %p208 = scmp.eq.s32.totalorder %s34, 1
      %p209 = por %p207, %p208
      %p211 = scmp.ne.s32.totalorder %s196, %s210
      %p212 = scmp.eq.s32.totalorder %s34, 0
      %p213 = por %p211, %p212
      %s215 = sadd.s32 %s214, 1
      %p218 = scmp.eq.s32.totalorder %s28, 1
      %p219 = scmp.ne.s32.totalorder %s214, %s216
      %p220 = scmp.eq.s32.totalorder %s28, 0
      %p221 = por %p219, %p220
      %p222 = scmp.ne.s32.totalorder %s214, %s216
      %p223 = scmp.eq.s32.totalorder %s33, 1
      %p224 = por %p222, %p223
      %p225 = scmp.ne.s32.totalorder %s216, %s217
      %p226 = scmp.eq.s32.totalorder %s33, 0
      %p227 = por %p225, %p226
      %p228 = scmp.ne.s32.totalorder %s216, %s217
      %p229 = scmp.eq.s32.totalorder %s34, 1
      %p230 = por %p228, %p229
      %p232 = scmp.ne.s32.totalorder %s217, %s231
      %p233 = scmp.eq.s32.totalorder %s34, 0
      %p234 = por %p232, %p233
      %s236 = sadd.s32 %s235, 1
      %p239 = scmp.eq.s32.totalorder %s28, 1
      %p240 = scmp.ne.s32.totalorder %s235, %s237
      %p241 = scmp.eq.s32.totalorder %s28, 0
      %p242 = por %p240, %p241
      %p243 = scmp.ne.s32.totalorder %s235, %s237
      %p244 = scmp.eq.s32.totalorder %s33, 1
      %p245 = por %p243, %p244
      %p246 = scmp.ne.s32.totalorder %s237, %s238
      %p247 = scmp.eq.s32.totalorder %s33, 0
      %p248 = por %p246, %p247
      %p249 = scmp.ne.s32.totalorder %s237, %s238
      %p250 = scmp.eq.s32.totalorder %s34, 1
      %p251 = por %p249, %p250
      %p253 = scmp.ne.s32.totalorder %s238, %s252
      %p254 = scmp.eq.s32.totalorder %s34, 0
      %p255 = por %p253, %p254
      %s257 = sadd.s32 %s256, 1
      %p260 = scmp.eq.s32.totalorder %s28, 1
      %p261 = scmp.ne.s32.totalorder %s256, %s258
      %p262 = scmp.eq.s32.totalorder %s28, 0
      %p263 = por %p261, %p262
      %p264 = scmp.ne.s32.totalorder %s256, %s258
      %p265 = scmp.eq.s32.totalorder %s33, 1
      %p266 = por %p264, %p265
      %p267 = scmp.ne.s32.totalorder %s258, %s259
      %p268 = scmp.eq.s32.totalorder %s33, 0
      %p269 = por %p267, %p268
      %p270 = scmp.ne.s32.totalorder %s258, %s259
      %p271 = scmp.eq.s32.totalorder %s34, 1
      %p272 = por %p270, %p271
      %p274 = scmp.ne.s32.totalorder %s259, %s273
      %p275 = scmp.eq.s32.totalorder %s34, 0
      %p276 = por %p274, %p275
      %s277 = ssub.s32 %s28, %s35
      %p278 = scmp.eq.s32.totalorder %s277, 0
      %s280 = sadd.s32 %s279, 1
      %s281 = scalar_select %p278, %s279, %s280
      %p284 = pneg %p278
      %p285 = scmp.eq.s32.totalorder %s28, 1
      %p286 = por %p284, %p285
      %p287 = scmp.ne.s32.totalorder %s279, %s282
      %p288 = scmp.eq.s32.totalorder %s28, 0
      %p289 = por %p287, %p288
      %p290 = scmp.ne.s32.totalorder %s279, %s282
      %p291 = scmp.eq.s32.totalorder %s33, 1
      %p292 = por %p290, %p291
      %p293 = scmp.ne.s32.totalorder %s282, %s283
      %p294 = scmp.eq.s32.totalorder %s33, 0
      %p295 = por %p293, %p294
      %p296 = scmp.ne.s32.totalorder %s282, %s283
      %p297 = scmp.eq.s32.totalorder %s34, 1
      %p298 = por %p296, %p297
      %p300 = scmp.ne.s32.totalorder %s283, %s299
      %p301 = scmp.eq.s32.totalorder %s34, 0
      %p302 = por %p300, %p301
      %p303 = scmp.le.s32.totalorder 1, %s28
      %p304 = scmp.lt.s32.totalorder %s28, 3
      %p305 = pnand %p303, %p304
      %p306 = pneg %p305
      // Predicated region
      $region9: #{tpu_custom_call.1} parent=5 // pred_check
        _
      $region10: #{tpu_custom_call.1} parent=5 // pred_check_branch
        %308 = sbr.rel (%p305) target = $region12
      $region11: #{tpu_custom_call.1} parent=5 // pred_region
        %s309 = ssub.s32 %s28, 1
        // Predicated region
        $region13: #{tpu_custom_call.1} parent=11 // pred_check
          %p310 = pneg %p101
        $region14: #{tpu_custom_call.1} parent=11 // pred_check_branch
          %312 = sbr.rel (%p310) target = $region16
        $region15: #{tpu_custom_call.1} parent=11 // pred_region
          %314 = vsyncadd [#allocation7], 0
          %s315 = sshll.u32 %s2, 4
          %s316 = int_to_ptr.hbm [resolvable:$true] %s315
          %s317 = sshll.u32 [#allocation8], 4
          %s318 = int_to_ptr.vmem [resolvable:$true] %s317
          %323 = dma.hbm_to_vmem [thread:$0]  %s316, 3072, %s318, [#allocation7], 192, 192, 12
        $region16: #{tpu_custom_call.1} parent=11 // pred_fallthru
          _
        // Predicated region
        $region17: #{tpu_custom_call.1} parent=11 // pred_check
          %p324 = pneg %p122
        $region18: #{tpu_custom_call.1} parent=11 // pred_check_branch
          %326 = sbr.rel (%p324) target = $region20
        $region19: #{tpu_custom_call.1} parent=11 // pred_region
          %328 = vsyncadd [#allocation10], 0
          %s329 = sshll.u32 %s3, 4
          %s330 = int_to_ptr.hbm [resolvable:$true] %s329
          %s331 = sshll.u32 [#allocation9], 4
          %s332 = int_to_ptr.vmem [resolvable:$true] %s331
          %337 = dma.hbm_to_vmem [thread:$0]  %s330, 1024, %s332, [#allocation10], 64, 64, 4
        $region20: #{tpu_custom_call.1} parent=11 // pred_fallthru
          _
        // Predicated region
        $region21: #{tpu_custom_call.1} parent=11 // pred_check
          %p338 = pneg %p143
        $region22: #{tpu_custom_call.1} parent=11 // pred_check_branch
          %340 = sbr.rel (%p338) target = $region24
        $region23: #{tpu_custom_call.1} parent=11 // pred_region
          _
        $region24: #{tpu_custom_call.1} parent=11 // pred_fallthru
          _
        // Predicated region
        $region25: #{tpu_custom_call.1} parent=11 // pred_check
          %p341 = pneg %p164
        $region26: #{tpu_custom_call.1} parent=11 // pred_check_branch
          %343 = sbr.rel (%p341) target = $region28
        $region27: #{tpu_custom_call.1} parent=11 // pred_region
          %345 = vsyncadd [#allocation10], 0
          %s346 = sshll.u32 %s5, 4
          %s347 = int_to_ptr.hbm [resolvable:$true] %s346
          %s348 = sshll.u32 [#allocation11], 4
          %s349 = int_to_ptr.vmem [resolvable:$true] %s348
          %354 = dma.hbm_to_vmem [thread:$0]  %s347, 2048, %s349, [#allocation10], 128, 128, 8
        $region28: #{tpu_custom_call.1} parent=11 // pred_fallthru
          _
        // Predicated region
        $region29: #{tpu_custom_call.1} parent=11 // pred_check
          %p355 = pneg %p185
        $region30: #{tpu_custom_call.1} parent=11 // pred_check_branch
          %357 = sbr.rel (%p355) target = $region32
        $region31: #{tpu_custom_call.1} parent=11 // pred_region
          _
        $region32: #{tpu_custom_call.1} parent=11 // pred_fallthru
          _
        // Predicated region
        $region33: #{tpu_custom_call.1} parent=11 // pred_check
          %p358 = pneg %p206
        $region34: #{tpu_custom_call.1} parent=11 // pred_check_branch
          %360 = sbr.rel (%p358) target = $region36
        $region35: #{tpu_custom_call.1} parent=11 // pred_region
          %362 = vsyncadd [#allocation13], 0
          %s363 = sshll.u32 %s7, 4
          %s364 = int_to_ptr.hbm [resolvable:$true] %s363
          %s365 = sshll.u32 [#allocation12], 4
          %s366 = int_to_ptr.vmem [resolvable:$true] %s365
          %371 = dma.hbm_to_vmem [thread:$0]  %s364, 2048, %s366, [#allocation13], 64, 64, 4
        $region36: #{tpu_custom_call.1} parent=11 // pred_fallthru
          _
        // Predicated region
        $region37: #{tpu_custom_call.1} parent=11 // pred_check
          %p372 = pneg %p227
        $region38: #{tpu_custom_call.1} parent=11 // pred_check_branch
          %374 = sbr.rel (%p372) target = $region40
        $region39: #{tpu_custom_call.1} parent=11 // pred_region
          _
        $region40: #{tpu_custom_call.1} parent=11 // pred_fallthru
          _
        // Predicated region
        $region41: #{tpu_custom_call.1} parent=11 // pred_check
          %p375 = pneg %p248
        $region42: #{tpu_custom_call.1} parent=11 // pred_check_branch
          %377 = sbr.rel (%p375) target = $region44
        $region43: #{tpu_custom_call.1} parent=11 // pred_region
          %379 = vsyncadd [#allocation13], 0
          %s380 = sshll.u32 %s9, 4
          %s381 = int_to_ptr.hbm [resolvable:$true] %s380
          %s382 = sshll.u32 [#allocation14], 4
          %s383 = int_to_ptr.vmem [resolvable:$true] %s382
          %388 = dma.hbm_to_vmem [thread:$0]  %s381, 1024, %s383, [#allocation13], 64, 64, 4
        $region44: #{tpu_custom_call.1} parent=11 // pred_fallthru
          _
        // Predicated region
        $region45: #{tpu_custom_call.1} parent=11 // pred_check
          %p389 = pneg %p269
        $region46: #{tpu_custom_call.1} parent=11 // pred_check_branch
          %391 = sbr.rel (%p389) target = $region48
        $region47: #{tpu_custom_call.1} parent=11 // pred_region
          _
        $region48: #{tpu_custom_call.1} parent=11 // pred_fallthru
          _
      $region12: #{tpu_custom_call.1} parent=5 // pred_fallthru
        _
      %p392 = scmp.lt.s32.totalorder %s28, 2
      // Predicated region
      $region49: #{tpu_custom_call.1} parent=5 // pred_check
        %p393 = pneg %p392
      $region50: #{tpu_custom_call.1} parent=5 // pred_check_branch
        %395 = sbr.rel (%p393) target = $region52
      $region51: #{tpu_custom_call.1} parent=5 // pred_region
        // Predicated region
        $region53: #{tpu_custom_call.1} parent=51 // pred_check
          %p396 = pneg %p48
        $region54: #{tpu_custom_call.1} parent=51 // pred_check_branch
          %398 = sbr.rel (%p396) target = $region56
        $region55: #{tpu_custom_call.1} parent=51 // pred_region
          %s399 = sand.u32 %s38, 1
          %s400 = scalar_lea.sflag [#allocation4], %s399
          %s401 = sand.u32 %s38, 1
          %s402 = smul.addr %s401, 32
          %s403 = scalar_lea.vmem [#allocation3], %s402
          %405 = vsyncadd %s400, 0
          %s406 = smul.addr %s28, 4
          %s407 = smul.addr %s406, 8
          %s408 = scalar_lea.hbm %s0, %s407
          %s409 = sshll.u32 %s408, 4
          %s410 = int_to_ptr.hbm [resolvable:$true] %s409
          %s411 = sshll.u32 %s403, 4
          %s412 = int_to_ptr.vmem [resolvable:$true] %s411
          %417 = dma.hbm_to_vmem [thread:$0]  %s410, 512, %s412, %s400, 128, 128, 8
        $region56: #{tpu_custom_call.1} parent=51 // pred_fallthru
          _
        // Predicated region
        $region57: #{tpu_custom_call.1} parent=51 // pred_check
          %p418 = pneg %p74
        $region58: #{tpu_custom_call.1} parent=51 // pred_check_branch
          %420 = sbr.rel (%p418) target = $region60
        $region59: #{tpu_custom_call.1} parent=51 // pred_region
          %s421 = sand.u32 %s28, 1
          %s422 = scalar_lea.sflag [#allocation7], %s421
          %s423 = sand.u32 %s64, 1
          %s424 = smul.addr %s423, 8
          %s425 = scalar_lea.vmem [#allocation6], %s424
          %427 = vsyncadd %s422, 0
          %s428 = smul.addr %s28, 8
          %s429 = scalar_lea.hbm %s1, %s428
          %s431 = sshll.u32 %s429, 4
          %s432 = int_to_ptr.hbm [resolvable:$true] %s431
          %s433 = sshll.u32 %s425, 4
          %s434 = int_to_ptr.vmem [resolvable:$true] %s433
          %436 = dma.hbm_to_vmem [thread:$0]  %s432, 128, %s434, %s422
        $region60: #{tpu_custom_call.1} parent=51 // pred_fallthru
          _
      $region52: #{tpu_custom_call.1} parent=5 // pred_fallthru
        _
      %p437 = scmp.le.s32.totalorder 1, %s28
      %p438 = scmp.lt.s32.totalorder %s28, 3
      %p439 = pnand %p437, %p438
      %p440 = pneg %p439
      // Predicated region
      $region61: #{tpu_custom_call.1} parent=5 // pred_check
        _
      $region62: #{tpu_custom_call.1} parent=5 // pred_check_branch
        %442 = sbr.rel (%p439) target = $region64
      $region63: #{tpu_custom_call.1} parent=5 // pred_region
        %s443 = ssub.s32 %s28, 1
        %s444 = sand.u32 %s41, 1
        %s445 = scalar_lea.sflag [#allocation4], %s444
        %s446 = sand.u32 %s41, 1
        %s447 = smul.addr %s446, 32
        %s448 = scalar_lea.vmem [#allocation3], %s447
        // Predicated region
        $region65: #{tpu_custom_call.1} parent=63 // pred_check
          %p449 = pneg %p54
        $region66: #{tpu_custom_call.1} parent=63 // pred_check_branch
          %451 = sbr.rel (%p449) target = $region68
        $region67: #{tpu_custom_call.1} parent=63 // pred_region
          %453 = dma.done %s445, 512
        $region68: #{tpu_custom_call.1} parent=63 // pred_fallthru
          _
        %s454 = sand.u32 %s33, 1
        %s455 = scalar_lea.sflag [#allocation7], %s454
        %s456 = sand.u32 %s67, 1
        %s457 = smul.addr %s456, 8
        %s458 = scalar_lea.vmem [#allocation6], %s457
        // Predicated region
        $region69: #{tpu_custom_call.1} parent=63 // pred_check
          %p459 = pneg %p80
        $region70: #{tpu_custom_call.1} parent=63 // pred_check_branch
          %461 = sbr.rel (%p459) target = $region72
        $region71: #{tpu_custom_call.1} parent=63 // pred_region
          %463 = dma.done %s455, 128
        $region72: #{tpu_custom_call.1} parent=63 // pred_fallthru
          _
        // Predicated region
        $region73: #{tpu_custom_call.1} parent=63 // pred_check
          %p464 = pneg %p101
        $region74: #{tpu_custom_call.1} parent=63 // pred_check_branch
          %466 = sbr.rel (%p464) target = $region76
        $region75: #{tpu_custom_call.1} parent=63 // pred_region
          %468 = dma.done [#allocation7], 3072
        $region76: #{tpu_custom_call.1} parent=63 // pred_fallthru
          _
        // Predicated region
        $region77: #{tpu_custom_call.1} parent=63 // pred_check
          %p469 = pneg %p122
        $region78: #{tpu_custom_call.1} parent=63 // pred_check_branch
          %471 = sbr.rel (%p469) target = $region80
        $region79: #{tpu_custom_call.1} parent=63 // pred_region
          %473 = dma.done [#allocation10], 1024
        $region80: #{tpu_custom_call.1} parent=63 // pred_fallthru
          _
        // Predicated region
        $region81: #{tpu_custom_call.1} parent=63 // pred_check
          %p474 = pneg %p164
        $region82: #{tpu_custom_call.1} parent=63 // pred_check_branch
          %476 = sbr.rel (%p474) target = $region84
        $region83: #{tpu_custom_call.1} parent=63 // pred_region
          %478 = dma.done [#allocation10], 2048
        $region84: #{tpu_custom_call.1} parent=63 // pred_fallthru
          _
        // Predicated region
        $region85: #{tpu_custom_call.1} parent=63 // pred_check
          %p479 = pneg %p206
        $region86: #{tpu_custom_call.1} parent=63 // pred_check_branch
          %481 = sbr.rel (%p479) target = $region88
        $region87: #{tpu_custom_call.1} parent=63 // pred_region
          %483 = dma.done [#allocation13], 2048
        $region88: #{tpu_custom_call.1} parent=63 // pred_fallthru
          _
        // Predicated region
        $region89: #{tpu_custom_call.1} parent=63 // pred_check
          %p484 = pneg %p248
        $region90: #{tpu_custom_call.1} parent=63 // pred_check_branch
          %486 = sbr.rel (%p484) target = $region92
        $region91: #{tpu_custom_call.1} parent=63 // pred_region
          %488 = dma.done [#allocation13], 1024
        $region92: #{tpu_custom_call.1} parent=63 // pred_fallthru
          _
        %s489 = sand.u32 %s41, 1
        %s490 = scalar_lea.sflag [#allocation4], %s489
        %s491 = sand.u32 %s41, 1
        %s492 = smul.addr %s491, 32
        %s493 = scalar_lea.vmem [#allocation3], %s492
        %p494 = pneg %p54
        %p495 = pneg %p51
        %s496 = sand.u32 %s33, 1
        %s497 = scalar_lea.sflag [#allocation7], %s496
        %s498 = sand.u32 %s67, 1
        %s499 = smul.addr %s498, 8
        %s500 = scalar_lea.vmem [#allocation6], %s499
        %p501 = pneg %p80
        %p502 = pneg %p77
        %p503 = pneg %p101
        %p504 = pneg %p98
        %p505 = pneg %p122
        %p506 = pneg %p119
        %p507 = pneg %p143
        %p508 = pneg %p140
        %p509 = pneg %p164
        %p510 = pneg %p161
        %p511 = pneg %p185
        %p512 = pneg %p182
        %p513 = pneg %p206
        %p514 = pneg %p203
        %p515 = pneg %p227
        %p516 = pneg %p224
        %p517 = pneg %p248
        %p518 = pneg %p245
        %p519 = pneg %p269
        %p520 = pneg %p266
        %p521 = pneg %p295
        %p522 = pneg %p292
        %s523 = sand.u32 %s282, 1
        %s524 = scalar_lea.sflag [#allocation5], %s523
        %s525 = sand.u32 %s282, 1
        %s526 = smul.addr %s525, 32
        %s527 = scalar_lea.vmem [#allocation15], %s526
        %v529 = vld [vmem:[%s448] sm:$0xff]
        %v530 = vld [vmem:[%s448 + $0x8] sm:$0xff]
        %v531 = vld [vmem:[%s448 + $0x10] sm:$0xff]
        %v532 = vld [vmem:[%s448 + $0x18] sm:$0xff]
        %533 = vst [vmem:[#allocation2] sm:$0xff] %v529
        %534 = vst [vmem:[#allocation2 + $0x10] sm:$0xff] %v530
        %535 = vst [vmem:[#allocation2 + $0x20] sm:$0xff] %v531
        %536 = vst [vmem:[#allocation2 + $0x30] sm:$0xff] %v532
        %v537 = vld [vmem:[%s458] sm:$0xff]
        %538 = vst [vmem:[#allocation2 + $0x8] sm:$0xff] %v537
        %539 = vst [vmem:[#allocation2 + $0x18] sm:$0xff] %v537
        %540 = vst [vmem:[#allocation2 + $0x28] sm:$0xff] %v537
        %541 = vst [vmem:[#allocation2 + $0x38] sm:$0xff] %v537
        %v542 = vld [vmem:[#allocation2] sm:$0xff]
        %v543 = vld [vmem:[#allocation2 + $0x8] sm:$0xff]
        %v544 = vld [vmem:[#allocation2 + $0x10] sm:$0xff]
        %v545 = vld [vmem:[#allocation2 + $0x18] sm:$0xff]
        %v546 = vld [vmem:[#allocation2 + $0x20] sm:$0xff]
        %v547 = vld [vmem:[#allocation2 + $0x28] sm:$0xff]
        %v548 = vld [vmem:[#allocation2 + $0x30] sm:$0xff]
        %v549 = vld [vmem:[#allocation2 + $0x38] sm:$0xff]
        %v550 = vpack.c.bf16 %v543, %v542
        %v551 = vpack.c.bf16 %v545, %v544
        %v552 = vpack.c.bf16 %v547, %v546
        %v553 = vpack.c.bf16 %v549, %v548
        %v554 = vld [vmem:[#allocation8] sm:$0xff]
        %v555 = vld [vmem:[#allocation8 + $0x8] sm:$0xf]
        %v556 = vld [vmem:[#allocation8 + $0xc] sm:$0xff]
        %v557 = vld [vmem:[#allocation8 + $0x14] sm:$0xf]
        %v558 = vld [vmem:[#allocation8 + $0x18] sm:$0xff]
        %v559 = vld [vmem:[#allocation8 + $0x20] sm:$0xf]
        %v560 = vld [vmem:[#allocation8 + $0x24] sm:$0xff]
        %v561 = vld [vmem:[#allocation8 + $0x2c] sm:$0xf]
        %v562 = vld [vmem:[#allocation8 + $0x30] sm:$0xff]
        %v563 = vld [vmem:[#allocation8 + $0x38] sm:$0xf]
        %v564 = vld [vmem:[#allocation8 + $0x3c] sm:$0xff]
        %v565 = vld [vmem:[#allocation8 + $0x44] sm:$0xf]
        %v566 = vld [vmem:[#allocation8 + $0x48] sm:$0xff]
        %v567 = vld [vmem:[#allocation8 + $0x50] sm:$0xf]
        %v568 = vld [vmem:[#allocation8 + $0x54] sm:$0xff]
        %v569 = vld [vmem:[#allocation8 + $0x5c] sm:$0xf]
        %v570 = vld [vmem:[#allocation8 + $0x60] sm:$0xff]
        %v571 = vld [vmem:[#allocation8 + $0x68] sm:$0xf]
        %v572 = vld [vmem:[#allocation8 + $0x6c] sm:$0xff]
        %v573 = vld [vmem:[#allocation8 + $0x74] sm:$0xf]
        %v574 = vld [vmem:[#allocation8 + $0x78] sm:$0xff]
        %v575 = vld [vmem:[#allocation8 + $0x80] sm:$0xf]
        %v576 = vld [vmem:[#allocation8 + $0x84] sm:$0xff]
        %v577 = vld [vmem:[#allocation8 + $0x8c] sm:$0xf]
        %v578 = vld [vmem:[#allocation8 + $0x90] sm:$0xff]
        %v579 = vld [vmem:[#allocation8 + $0x98] sm:$0xf]
        %v580 = vld [vmem:[#allocation8 + $0x9c] sm:$0xff]
        %v581 = vld [vmem:[#allocation8 + $0xa4] sm:$0xf]
        %v582 = vld [vmem:[#allocation8 + $0xa8] sm:$0xff]
        %v583 = vld [vmem:[#allocation8 + $0xb0] sm:$0xf]
        %v584 = vld [vmem:[#allocation8 + $0xb4] sm:$0xff]
        %v585 = vld [vmem:[#allocation8 + $0xbc] sm:$0xf]
        %v618 = vunpack.c.l.b16 %v554
        %v619 = vunpack.c.h.b16 %v554
        %v620 = vunpack.c.l.b16 %v555
        %v621 = vunpack.c.l.b16 %v556
        %v622 = vunpack.c.h.b16 %v556
        %v623 = vunpack.c.l.b16 %v557
        %v624 = vunpack.c.l.b16 %v558
        %v625 = vunpack.c.h.b16 %v558
        %v626 = vunpack.c.l.b16 %v559
        %v627 = vunpack.c.l.b16 %v560
        %v628 = vunpack.c.h.b16 %v560
        %v629 = vunpack.c.l.b16 %v561
        %v630 = vunpack.c.l.b16 %v562
        %v631 = vunpack.c.h.b16 %v562
        %v632 = vunpack.c.l.b16 %v563
        %v633 = vunpack.c.l.b16 %v564
        %v634 = vunpack.c.h.b16 %v564
        %v635 = vunpack.c.l.b16 %v565
        %v636 = vunpack.c.l.b16 %v566
        %v637 = vunpack.c.h.b16 %v566
        %v638 = vunpack.c.l.b16 %v567
        %v639 = vunpack.c.l.b16 %v568
        %v640 = vunpack.c.h.b16 %v568
        %v641 = vunpack.c.l.b16 %v569
        %v642 = vunpack.c.l.b16 %v570
        %v643 = vunpack.c.h.b16 %v570
        %v644 = vunpack.c.l.b16 %v571
        %v645 = vunpack.c.l.b16 %v572
        %v646 = vunpack.c.h.b16 %v572
        %v647 = vunpack.c.l.b16 %v573
        %v648 = vunpack.c.l.b16 %v574
        %v649 = vunpack.c.h.b16 %v574
        %v650 = vunpack.c.l.b16 %v575
        %v651 = vunpack.c.l.b16 %v576
        %v652 = vunpack.c.h.b16 %v576
        %v653 = vunpack.c.l.b16 %v577
        %v654 = vunpack.c.l.b16 %v578
        %v655 = vunpack.c.h.b16 %v578
        %v656 = vunpack.c.l.b16 %v579
        %v657 = vunpack.c.l.b16 %v580
        %v658 = vunpack.c.h.b16 %v580
        %v659 = vunpack.c.l.b16 %v581
        %v660 = vunpack.c.l.b16 %v582
        %v661 = vunpack.c.h.b16 %v582
        %v662 = vunpack.c.l.b16 %v583
        %v663 = vunpack.c.l.b16 %v584
        %v664 = vunpack.c.h.b16 %v584
        %v665 = vunpack.c.l.b16 %v585
        %v666 = vpack.c.b16 %v621, %v618
        %v667 = vpack.c.b16 %v622, %v619
        %v668 = vpack.c.b16 %v623, %v620
        %v669 = vpack.c.b16 %v627, %v624
        %v670 = vpack.c.b16 %v628, %v625
        %v671 = vpack.c.b16 %v629, %v626
        %v672 = vpack.c.b16 %v633, %v630
        %v673 = vpack.c.b16 %v634, %v631
        %v674 = vpack.c.b16 %v635, %v632
        %v675 = vpack.c.b16 %v639, %v636
        %v676 = vpack.c.b16 %v640, %v637
        %v677 = vpack.c.b16 %v641, %v638
        %v678 = vpack.c.b16 %v645, %v642
        %v679 = vpack.c.b16 %v646, %v643
        %v680 = vpack.c.b16 %v647, %v644
        %v681 = vpack.c.b16 %v651, %v648
        %v682 = vpack.c.b16 %v652, %v649
        %v683 = vpack.c.b16 %v653, %v650
        %v684 = vpack.c.b16 %v657, %v654
        %v685 = vpack.c.b16 %v658, %v655
        %v686 = vpack.c.b16 %v659, %v656
        %v687 = vpack.c.b16 %v663, %v660
        %v688 = vpack.c.b16 %v664, %v661
        %v689 = vpack.c.b16 %v665, %v662
        %714 = vmatpush.bf16.msra.mxu0 %v687
        %715 = vmatpush.bf16.msra.mxu0 %v684
        %716 = vmatpush.bf16.msra.mxu0 %v681
        %717 = vmatpush.bf16.msra.mxu0 %v678
        %718 = vmatpush.bf16.msra.mxu0 %v675
        %719 = vmatpush.bf16.msra.mxu0 %v672
        %720 = vmatpush.bf16.msra.mxu0 %v669
        %721 = vmatpush.bf16.msra.mxu0 %v666
        %722 = vmatmul.bf16.gmra.mxu0 %v550
        %v723 = vpop.f32.mrf.mxu0
        %v724 = vadd.f32 0.0, %v723
        %v725 = vpop.f32.mrf.mxu0
        %v726 = vadd.f32 0.0, %v725
        %727 = vmatmul.bf16.gmra.mxu0 %v551
        %v728 = vpop.f32.mrf.mxu0
        %v729 = vadd.f32 0.0, %v728
        %v730 = vpop.f32.mrf.mxu0
        %v731 = vadd.f32 0.0, %v730
        %732 = vmatmul.bf16.gmra.mxu0 %v552
        %v733 = vpop.f32.mrf.mxu0
        %v734 = vadd.f32 0.0, %v733
        %v735 = vpop.f32.mrf.mxu0
        %v736 = vadd.f32 0.0, %v735
        %737 = vmatmul.bf16.gmra.mxu0 %v553
        %v738 = vpop.f32.mrf.mxu0
        %v739 = vadd.f32 0.0, %v738
        %v740 = vpop.f32.mrf.mxu0
        %v741 = vadd.f32 0.0, %v740
        %742 = vdwg.mxu0
        %743 = vmatpush.bf16.msra.mxu0 %v688
        %744 = vmatpush.bf16.msra.mxu0 %v685
        %745 = vmatpush.bf16.msra.mxu0 %v682
        %746 = vmatpush.bf16.msra.mxu0 %v679
        %747 = vmatpush.bf16.msra.mxu0 %v676
        %748 = vmatpush.bf16.msra.mxu0 %v673
        %749 = vmatpush.bf16.msra.mxu0 %v670
        %750 = vmatpush.bf16.msra.mxu0 %v667
        %751 = vmatmul.bf16.gmra.mxu0 %v550
        %v752 = vpop.f32.mrf.mxu0
        %v753 = vadd.f32 0.0, %v752
        %v754 = vpop.f32.mrf.mxu0
        %v755 = vadd.f32 0.0, %v754
        %756 = vmatmul.bf16.gmra.mxu0 %v551
        %v757 = vpop.f32.mrf.mxu0
        %v758 = vadd.f32 0.0, %v757
        %v759 = vpop.f32.mrf.mxu0
        %v760 = vadd.f32 0.0, %v759
        %761 = vmatmul.bf16.gmra.mxu0 %v552
        %v762 = vpop.f32.mrf.mxu0
        %v763 = vadd.f32 0.0, %v762
        %v764 = vpop.f32.mrf.mxu0
        %v765 = vadd.f32 0.0, %v764
        %766 = vmatmul.bf16.gmra.mxu0 %v553
        %v767 = vpop.f32.mrf.mxu0
        %v768 = vadd.f32 0.0, %v767
        %v769 = vpop.f32.mrf.mxu0
        %v770 = vadd.f32 0.0, %v769
        %771 = vdwg.mxu0
        %772 = vmatpush.bf16.msra.mxu0 %v689
        %773 = vmatpush.bf16.msra.mxu0 %v686
        %774 = vmatpush.bf16.msra.mxu0 %v683
        %775 = vmatpush.bf16.msra.mxu0 %v680
        %776 = vmatpush.bf16.msra.mxu0 %v677
        %777 = vmatpush.bf16.msra.mxu0 %v674
        %778 = vmatpush.bf16.msra.mxu0 %v671
        %779 = vmatpush.bf16.msra.mxu0 %v668
        %780 = vmatmul.bf16.gmra.mxu0 %v550
        %v781 = vpop.f32.mrf.mxu0
        %v782 = vadd.f32 0.0, %v781
        %v783 = vpop.f32.mrf.mxu0
        %v784 = vadd.f32 0.0, %v783
        %785 = vmatmul.bf16.gmra.mxu0 %v551
        %v786 = vpop.f32.mrf.mxu0
        %v787 = vadd.f32 0.0, %v786
        %v788 = vpop.f32.mrf.mxu0
        %v789 = vadd.f32 0.0, %v788
        %790 = vmatmul.bf16.gmra.mxu0 %v552
        %v791 = vpop.f32.mrf.mxu0
        %v792 = vadd.f32 0.0, %v791
        %v793 = vpop.f32.mrf.mxu0
        %v794 = vadd.f32 0.0, %v793
        %795 = vmatmul.bf16.gmra.mxu0 %v553
        %v796 = vpop.f32.mrf.mxu0
        %v797 = vadd.f32 0.0, %v796
        %v798 = vpop.f32.mrf.mxu0
        %v799 = vadd.f32 0.0, %v798
        %800 = vdwg.mxu0
        %v801 = vpack.c.bf16 %v724, %v724
        %v802 = vpack.c.bf16 %v726, %v726
        %v803 = vpack.c.bf16 %v729, %v729
        %v804 = vpack.c.bf16 %v731, %v731
        %v805 = vpack.c.bf16 %v734, %v734
        %v806 = vpack.c.bf16 %v736, %v736
        %v807 = vpack.c.bf16 %v739, %v739
        %v808 = vpack.c.bf16 %v741, %v741
        %v809 = vpack.c.bf16 %v753, %v753
        %v810 = vpack.c.bf16 %v755, %v755
        %v811 = vpack.c.bf16 %v758, %v758
        %v812 = vpack.c.bf16 %v760, %v760
        %v813 = vpack.c.bf16 %v763, %v763
        %v814 = vpack.c.bf16 %v765, %v765
        %v815 = vpack.c.bf16 %v768, %v768
        %v816 = vpack.c.bf16 %v770, %v770
        %v819 = vunpack.c.l.b16 %v801
        %v820 = vunpack.c.l.b16 %v802
        %v821 = vpack.c.b16 %v820, %v819
        %v825 = vunpack.c.l.b16 %v809
        %v826 = vunpack.c.l.b16 %v810
        %v827 = vpack.c.b16 %v826, %v825
        %829 = vmatpush.bf16.xpose.msra.mxu0 0
        %830 = vmatpush.bf16.xpose.msra.mxu0 0
        %831 = vmatpush.bf16.xpose.msra.mxu0 0
        %832 = vmatpush.bf16.xpose.msra.mxu0 0
        %833 = vmatpush.bf16.xpose.msra.mxu0 0
        %834 = vmatpush.bf16.xpose.msra.mxu0 0
        %835 = vmatpush.bf16.xpose.msra.mxu0 0
        %836 = vmatpush.bf16.xpose.msra.mxu0 %v827
        %837 = vmatmul.bf16.gmra.mxu0 %v821
        %v838 = vpop.f32.mrf.mxu0
        %v839 = vadd.f32 0.0, %v838
        %v840 = vpop.f32.mrf.mxu0
        %v841 = vadd.f32 0.0, %v840
        %842 = vdwg.mxu0
        %v845 = vunpack.c.l.b16 %v803
        %v846 = vunpack.c.l.b16 %v804
        %v847 = vpack.c.b16 %v846, %v845
        %v851 = vunpack.c.l.b16 %v811
        %v852 = vunpack.c.l.b16 %v812
        %v853 = vpack.c.b16 %v852, %v851
        %855 = vmatpush.bf16.xpose.msra.mxu0 0
        %856 = vmatpush.bf16.xpose.msra.mxu0 0
        %857 = vmatpush.bf16.xpose.msra.mxu0 0
        %858 = vmatpush.bf16.xpose.msra.mxu0 0
        %859 = vmatpush.bf16.xpose.msra.mxu0 0
        %860 = vmatpush.bf16.xpose.msra.mxu0 0
        %861 = vmatpush.bf16.xpose.msra.mxu0 0
        %862 = vmatpush.bf16.xpose.msra.mxu0 %v853
        %863 = vmatmul.bf16.gmra.mxu0 %v847
        %v864 = vpop.f32.mrf.mxu0
        %v865 = vadd.f32 0.0, %v864
        %v866 = vpop.f32.mrf.mxu0
        %v867 = vadd.f32 0.0, %v866
        %868 = vdwg.mxu0
        %v871 = vunpack.c.l.b16 %v805
        %v872 = vunpack.c.l.b16 %v806
        %v873 = vpack.c.b16 %v872, %v871
        %v877 = vunpack.c.l.b16 %v813
        %v878 = vunpack.c.l.b16 %v814
        %v879 = vpack.c.b16 %v878, %v877
        %881 = vmatpush.bf16.xpose.msra.mxu0 0
        %882 = vmatpush.bf16.xpose.msra.mxu0 0
        %883 = vmatpush.bf16.xpose.msra.mxu0 0
        %884 = vmatpush.bf16.xpose.msra.mxu0 0
        %885 = vmatpush.bf16.xpose.msra.mxu0 0
        %886 = vmatpush.bf16.xpose.msra.mxu0 0
        %887 = vmatpush.bf16.xpose.msra.mxu0 0
        %888 = vmatpush.bf16.xpose.msra.mxu0 %v879
        %889 = vmatmul.bf16.gmra.mxu0 %v873
        %v890 = vpop.f32.mrf.mxu0
        %v891 = vadd.f32 0.0, %v890
        %v892 = vpop.f32.mrf.mxu0
        %v893 = vadd.f32 0.0, %v892
        %894 = vdwg.mxu0
        %v897 = vunpack.c.l.b16 %v807
        %v898 = vunpack.c.l.b16 %v808
        %v899 = vpack.c.b16 %v898, %v897
        %v903 = vunpack.c.l.b16 %v815
        %v904 = vunpack.c.l.b16 %v816
        %v905 = vpack.c.b16 %v904, %v903
        %907 = vmatpush.bf16.xpose.msra.mxu0 0
        %908 = vmatpush.bf16.xpose.msra.mxu0 0
        %909 = vmatpush.bf16.xpose.msra.mxu0 0
        %910 = vmatpush.bf16.xpose.msra.mxu0 0
        %911 = vmatpush.bf16.xpose.msra.mxu0 0
        %912 = vmatpush.bf16.xpose.msra.mxu0 0
        %913 = vmatpush.bf16.xpose.msra.mxu0 0
        %914 = vmatpush.bf16.xpose.msra.mxu0 %v905
        %915 = vmatmul.bf16.gmra.mxu0 %v899
        %v916 = vpop.f32.mrf.mxu0
        %v917 = vadd.f32 0.0, %v916
        %v918 = vpop.f32.mrf.mxu0
        %v919 = vadd.f32 0.0, %v918
        %920 = vdwg.mxu0
        %v921 = vlaneseq
        %v922 = vshrl.u32 %v921, 7
        %v923 = vadd.s32 %v922, 8
        %v924 = vlaneseq
        %v925 = vand.u32 %v924, 127
        %vm926 = vcmp.le.s32.totalorder %v925, %v922
        %vm927 = vcmp.le.s32.totalorder %v925, %v923
        %v928 = vsel %vm926, 1, 0
        %v929 = vsel %vm927, 1, 0
        %vm930 = vcmp.eq.s32.totalorder %v928, 1
        %vm931 = vcmp.eq.s32.totalorder %v929, 1
        %v932 = vsel %vm930, %v839, -1e+30
        %v933 = vsel %vm931, %v841, -1e+30
        %v934 = vsel %vm930, %v865, -1e+30
        %v935 = vsel %vm931, %v867, -1e+30
        %v936 = vsel %vm930, %v891, -1e+30
        %v937 = vsel %vm931, %v893, -1e+30
        %v938 = vsel %vm930, %v917, -1e+30
        %v939 = vsel %vm931, %v919, -1e+30
        %vm940 = vcmask 130048
        %v941 = vsel %vm940, %v932, -inf
        %942 = vmax.xlane.f32.xlu0 %v941
        %v943 = vpop.xlane.xlu0 %942
        %v944 = vsel %vm940, %v933, -inf
        %945 = vmax.xlane.f32.xlu0 %v944
        %v946 = vpop.xlane.xlu0 %945
        %v947 = vsel %vm940, %v934, -inf
        %948 = vmax.xlane.f32.xlu0 %v947
        %v949 = vpop.xlane.xlu0 %948
        %v950 = vsel %vm940, %v935, -inf
        %951 = vmax.xlane.f32.xlu0 %v950
        %v952 = vpop.xlane.xlu0 %951
        %v953 = vsel %vm940, %v936, -inf
        %954 = vmax.xlane.f32.xlu0 %v953
        %v955 = vpop.xlane.xlu0 %954
        %v956 = vsel %vm940, %v937, -inf
        %957 = vmax.xlane.f32.xlu0 %v956
        %v958 = vpop.xlane.xlu0 %957
        %v959 = vsel %vm940, %v938, -inf
        %960 = vmax.xlane.f32.xlu0 %v959
        %v961 = vpop.xlane.xlu0 %960
        %v962 = vsel %vm940, %v939, -inf
        %963 = vmax.xlane.f32.xlu0 %v962
        %v964 = vpop.xlane.xlu0 %963
        %v965 = vsub.f32 %v932, %v943
        %v966 = vsub.f32 %v933, %v946
        %v967 = vsub.f32 %v934, %v949
        %v968 = vsub.f32 %v935, %v952
        %v969 = vsub.f32 %v936, %v955
        %v970 = vsub.f32 %v937, %v958
        %v971 = vsub.f32 %v938, %v961
        %v972 = vsub.f32 %v939, %v964
        %v973 = vmul.f32 %v965, 1.442695
        %v974 = vpow.pop %v973
        %v975 = vmul.f32 %v966, 1.442695
        %v976 = vpow.pop %v975
        %v977 = vmul.f32 %v967, 1.442695
        %v978 = vpow.pop %v977
        %v979 = vmul.f32 %v968, 1.442695
        %v980 = vpow.pop %v979
        %v981 = vmul.f32 %v969, 1.442695
        %v982 = vpow.pop %v981
        %v983 = vmul.f32 %v970, 1.442695
        %v984 = vpow.pop %v983
        %v985 = vmul.f32 %v971, 1.442695
        %v986 = vpow.pop %v985
        %v987 = vmul.f32 %v972, 1.442695
        %v988 = vpow.pop %v987
        %v989 = vsel %vm940, %v974, 0.0
        %990 = vadd.xlane.f32.xlu0 %v989
        %v991 = vpop.xlane.xlu0 %990
        %v992 = vsel %vm940, %v976, 0.0
        %993 = vadd.xlane.f32.xlu0 %v992
        %v994 = vpop.xlane.xlu0 %993
        %v995 = vsel %vm940, %v978, 0.0
        %996 = vadd.xlane.f32.xlu0 %v995
        %v997 = vpop.xlane.xlu0 %996
        %v998 = vsel %vm940, %v980, 0.0
        %999 = vadd.xlane.f32.xlu0 %v998
        %v1000 = vpop.xlane.xlu0 %999
        %v1001 = vsel %vm940, %v982, 0.0
        %1002 = vadd.xlane.f32.xlu0 %v1001
        %v1003 = vpop.xlane.xlu0 %1002
        %v1004 = vsel %vm940, %v984, 0.0
        %1005 = vadd.xlane.f32.xlu0 %v1004
        %v1006 = vpop.xlane.xlu0 %1005
        %v1007 = vsel %vm940, %v986, 0.0
        %1008 = vadd.xlane.f32.xlu0 %v1007
        %v1009 = vpop.xlane.xlu0 %1008
        %v1010 = vsel %vm940, %v988, 0.0
        %1011 = vadd.xlane.f32.xlu0 %v1010
        %v1012 = vpop.xlane.xlu0 %1011
        %v1013 = vrcp.pop %v991
        %v1014 = vrcp.pop %v994
        %v1015 = vrcp.pop %v997
        %v1016 = vrcp.pop %v1000
        %v1017 = vrcp.pop %v1003
        %v1018 = vrcp.pop %v1006
        %v1019 = vrcp.pop %v1009
        %v1020 = vrcp.pop %v1012
        %v1021 = vmul.f32 %v974, %v1013
        %v1022 = vmul.f32 %v976, %v1014
        %v1023 = vmul.f32 %v978, %v1015
        %v1024 = vmul.f32 %v980, %v1016
        %v1025 = vmul.f32 %v982, %v1017
        %v1026 = vmul.f32 %v984, %v1018
        %v1027 = vmul.f32 %v986, %v1019
        %v1028 = vmul.f32 %v988, %v1020
        %v1029 = vpack.c.bf16 %v1021, %v1021
        %v1030 = vpack.c.bf16 %v1022, %v1022
        %v1031 = vpack.c.bf16 %v1023, %v1023
        %v1032 = vpack.c.bf16 %v1024, %v1024
        %v1033 = vpack.c.bf16 %v1025, %v1025
        %v1034 = vpack.c.bf16 %v1026, %v1026
        %v1035 = vpack.c.bf16 %v1027, %v1027
        %v1036 = vpack.c.bf16 %v1028, %v1028
        %v1037 = vpack.c.bf16 %v782, %v782
        %v1038 = vpack.c.bf16 %v784, %v784
        %v1039 = vpack.c.bf16 %v787, %v787
        %v1040 = vpack.c.bf16 %v789, %v789
        %v1041 = vpack.c.bf16 %v792, %v792
        %v1042 = vpack.c.bf16 %v794, %v794
        %v1043 = vpack.c.bf16 %v797, %v797
        %v1044 = vpack.c.bf16 %v799, %v799
        %v1047 = vunpack.c.l.b16 %v1029
        %v1048 = vunpack.c.l.b16 %v1030
        %v1049 = vpack.c.b16 %v1048, %v1047
        %v1052 = vunpack.c.l.b16 %v1037
        %v1053 = vunpack.c.l.b16 %v1038
        %v1054 = vpack.c.b16 %v1053, %v1052
        %v1057 = vsel %vm940, %v1049, 0
        %1059 = vmatpush.bf16.msra.mxu0 0
        %1060 = vmatpush.bf16.msra.mxu0 0
        %1061 = vmatpush.bf16.msra.mxu0 0
        %1062 = vmatpush.bf16.msra.mxu0 0
        %1063 = vmatpush.bf16.msra.mxu0 0
        %1064 = vmatpush.bf16.msra.mxu0 0
        %1065 = vmatpush.bf16.msra.mxu0 0
        %1066 = vmatpush.bf16.msra.mxu0 %v1054
        %1067 = vmatmul.bf16.gmra.mxu0 %v1057
        %v1068 = vpop.f32.mrf.mxu0
        %v1069 = vadd.f32 0.0, %v1068
        %v1070 = vpop.f32.mrf.mxu0
        %v1071 = vadd.f32 0.0, %v1070
        %1072 = vdwg.mxu0
        %v1075 = vunpack.c.l.b16 %v1031
        %v1076 = vunpack.c.l.b16 %v1032
        %v1077 = vpack.c.b16 %v1076, %v1075
        %v1080 = vunpack.c.l.b16 %v1039
        %v1081 = vunpack.c.l.b16 %v1040
        %v1082 = vpack.c.b16 %v1081, %v1080
        %v1085 = vsel %vm940, %v1077, 0
        %1087 = vmatpush.bf16.msra.mxu0 0
        %1088 = vmatpush.bf16.msra.mxu0 0
        %1089 = vmatpush.bf16.msra.mxu0 0
        %1090 = vmatpush.bf16.msra.mxu0 0
        %1091 = vmatpush.bf16.msra.mxu0 0
        %1092 = vmatpush.bf16.msra.mxu0 0
        %1093 = vmatpush.bf16.msra.mxu0 0
        %1094 = vmatpush.bf16.msra.mxu0 %v1082
        %1095 = vmatmul.bf16.gmra.mxu0 %v1085
        %v1096 = vpop.f32.mrf.mxu0
        %v1097 = vadd.f32 0.0, %v1096
        %v1098 = vpop.f32.mrf.mxu0
        %v1099 = vadd.f32 0.0, %v1098
        %1100 = vdwg.mxu0
        %v1103 = vunpack.c.l.b16 %v1033
        %v1104 = vunpack.c.l.b16 %v1034
        %v1105 = vpack.c.b16 %v1104, %v1103
        %v1108 = vunpack.c.l.b16 %v1041
        %v1109 = vunpack.c.l.b16 %v1042
        %v1110 = vpack.c.b16 %v1109, %v1108
        %v1113 = vsel %vm940, %v1105, 0
        %1115 = vmatpush.bf16.msra.mxu0 0
        %1116 = vmatpush.bf16.msra.mxu0 0
        %1117 = vmatpush.bf16.msra.mxu0 0
        %1118 = vmatpush.bf16.msra.mxu0 0
        %1119 = vmatpush.bf16.msra.mxu0 0
        %1120 = vmatpush.bf16.msra.mxu0 0
        %1121 = vmatpush.bf16.msra.mxu0 0
        %1122 = vmatpush.bf16.msra.mxu0 %v1110
        %1123 = vmatmul.bf16.gmra.mxu0 %v1113
        %v1124 = vpop.f32.mrf.mxu0
        %v1125 = vadd.f32 0.0, %v1124
        %v1126 = vpop.f32.mrf.mxu0
        %v1127 = vadd.f32 0.0, %v1126
        %1128 = vdwg.mxu0
        %v1131 = vunpack.c.l.b16 %v1035
        %v1132 = vunpack.c.l.b16 %v1036
        %v1133 = vpack.c.b16 %v1132, %v1131
        %v1136 = vunpack.c.l.b16 %v1043
        %v1137 = vunpack.c.l.b16 %v1044
        %v1138 = vpack.c.b16 %v1137, %v1136
        %v1141 = vsel %vm940, %v1133, 0
        %1143 = vmatpush.bf16.msra.mxu0 0
        %1144 = vmatpush.bf16.msra.mxu0 0
        %1145 = vmatpush.bf16.msra.mxu0 0
        %1146 = vmatpush.bf16.msra.mxu0 0
        %1147 = vmatpush.bf16.msra.mxu0 0
        %1148 = vmatpush.bf16.msra.mxu0 0
        %1149 = vmatpush.bf16.msra.mxu0 0
        %1150 = vmatpush.bf16.msra.mxu0 %v1138
        %1151 = vmatmul.bf16.gmra.mxu0 %v1141
        %v1152 = vpop.f32.mrf.mxu0
        %v1153 = vadd.f32 0.0, %v1152
        %v1154 = vpop.f32.mrf.mxu0
        %v1155 = vadd.f32 0.0, %v1154
        %1156 = vdwg.mxu0
        %v1157 = vpack.c.bf16 %v1071, %v1069
        %v1158 = vpack.c.bf16 %v1099, %v1097
        %v1159 = vpack.c.bf16 %v1127, %v1125
        %v1160 = vpack.c.bf16 %v1155, %v1153
        %v1161 = vld [vmem:[#allocation9] sm:$0xf]
        %v1162 = vld [vmem:[#allocation9 + $0x4] sm:$0xf]
        %v1163 = vld [vmem:[#allocation9 + $0x8] sm:$0xf]
        %v1164 = vld [vmem:[#allocation9 + $0xc] sm:$0xf]
        %v1165 = vld [vmem:[#allocation9 + $0x10] sm:$0xf]
        %v1166 = vld [vmem:[#allocation9 + $0x14] sm:$0xf]
        %v1167 = vld [vmem:[#allocation9 + $0x18] sm:$0xf]
        %v1168 = vld [vmem:[#allocation9 + $0x1c] sm:$0xf]
        %v1169 = vld [vmem:[#allocation9 + $0x20] sm:$0xf]
        %v1170 = vld [vmem:[#allocation9 + $0x24] sm:$0xf]
        %v1171 = vld [vmem:[#allocation9 + $0x28] sm:$0xf]
        %v1172 = vld [vmem:[#allocation9 + $0x2c] sm:$0xf]
        %v1173 = vld [vmem:[#allocation9 + $0x30] sm:$0xf]
        %v1174 = vld [vmem:[#allocation9 + $0x34] sm:$0xf]
        %v1175 = vld [vmem:[#allocation9 + $0x38] sm:$0xf]
        %v1176 = vld [vmem:[#allocation9 + $0x3c] sm:$0xf]
        %v1177 = vld [vmem:[%s4] sm:$0x1]
        %v1179 = vperm.slane %v1177, 0
        %v1197 = vunpack.c.l.b16 %v1161
        %v1198 = vunpack.c.l.b16 %v1162
        %v1199 = vunpack.c.l.b16 %v1163
        %v1200 = vunpack.c.l.b16 %v1164
        %v1201 = vunpack.c.l.b16 %v1165
        %v1202 = vunpack.c.l.b16 %v1166
        %v1203 = vunpack.c.l.b16 %v1167
        %v1204 = vunpack.c.l.b16 %v1168
        %v1205 = vunpack.c.l.b16 %v1169
        %v1206 = vunpack.c.l.b16 %v1170
        %v1207 = vunpack.c.l.b16 %v1171
        %v1208 = vunpack.c.l.b16 %v1172
        %v1209 = vunpack.c.l.b16 %v1173
        %v1210 = vunpack.c.l.b16 %v1174
        %v1211 = vunpack.c.l.b16 %v1175
        %v1212 = vunpack.c.l.b16 %v1176
        %v1213 = vpack.c.b16 %v1198, %v1197
        %v1214 = vpack.c.b16 %v1200, %v1199
        %v1215 = vpack.c.b16 %v1202, %v1201
        %v1216 = vpack.c.b16 %v1204, %v1203
        %v1217 = vpack.c.b16 %v1206, %v1205
        %v1218 = vpack.c.b16 %v1208, %v1207
        %v1219 = vpack.c.b16 %v1210, %v1209
        %v1220 = vpack.c.b16 %v1212, %v1211
        %1229 = vmatpush.bf16.msra.mxu0 %v1220
        %1230 = vmatpush.bf16.msra.mxu0 %v1219
        %1231 = vmatpush.bf16.msra.mxu0 %v1218
        %1232 = vmatpush.bf16.msra.mxu0 %v1217
        %1233 = vmatpush.bf16.msra.mxu0 %v1216
        %1234 = vmatpush.bf16.msra.mxu0 %v1215
        %1235 = vmatpush.bf16.msra.mxu0 %v1214
        %1236 = vmatpush.bf16.msra.mxu0 %v1213
        %1237 = vmatmul.bf16.gmra.mxu0 %v1157
        %v1238 = vpop.f32.mrf.mxu0
        %v1239 = vadd.f32 %v1179, %v1238
        %v1240 = vpop.f32.mrf.mxu0
        %v1241 = vadd.f32 %v1179, %v1240
        %1242 = vmatmul.bf16.gmra.mxu0 %v1158
        %v1243 = vpop.f32.mrf.mxu0
        %v1244 = vadd.f32 %v1179, %v1243
        %v1245 = vpop.f32.mrf.mxu0
        %v1246 = vadd.f32 %v1179, %v1245
        %1247 = vmatmul.bf16.gmra.mxu0 %v1159
        %v1248 = vpop.f32.mrf.mxu0
        %v1249 = vadd.f32 %v1179, %v1248
        %v1250 = vpop.f32.mrf.mxu0
        %v1251 = vadd.f32 %v1179, %v1250
        %1252 = vmatmul.bf16.gmra.mxu0 %v1160
        %v1253 = vpop.f32.mrf.mxu0
        %v1254 = vadd.f32 %v1179, %v1253
        %v1255 = vpop.f32.mrf.mxu0
        %v1256 = vadd.f32 %v1179, %v1255
        %1257 = vdwg.mxu0
        %v1258 = vadd.f32 %v542, %v1239
        %v1259 = vadd.f32 %v543, %v1241
        %v1260 = vadd.f32 %v544, %v1244
        %v1261 = vadd.f32 %v545, %v1246
        %v1262 = vadd.f32 %v546, %v1249
        %v1263 = vadd.f32 %v547, %v1251
        %v1264 = vadd.f32 %v548, %v1254
        %v1265 = vadd.f32 %v549, %v1256
        %1266 = vadd.xlane.f32.xlu0 %v1258
        %v1267 = vpop.xlane.xlu0 %1266
        %1268 = vadd.xlane.f32.xlu0 %v1259
        %v1269 = vpop.xlane.xlu0 %1268
        %1270 = vadd.xlane.f32.xlu0 %v1260
        %v1271 = vpop.xlane.xlu0 %1270
        %1272 = vadd.xlane.f32.xlu0 %v1261
        %v1273 = vpop.xlane.xlu0 %1272
        %1274 = vadd.xlane.f32.xlu0 %v1262
        %v1275 = vpop.xlane.xlu0 %1274
        %1276 = vadd.xlane.f32.xlu0 %v1263
        %v1277 = vpop.xlane.xlu0 %1276
        %1278 = vadd.xlane.f32.xlu0 %v1264
        %v1279 = vpop.xlane.xlu0 %1278
        %1280 = vadd.xlane.f32.xlu0 %v1265
        %v1281 = vpop.xlane.xlu0 %1280
        %v1282 = vrcp.pop 128.0
        %v1283 = vmul.f32 128.0, %v1282
        %v1284 = vsub.f32 1.0, %v1283
        %v1285 = vmul.f32 %v1282, %v1284
        %v1286 = vadd.f32 %v1282, %v1285
        %vm1287 = vweird.f32 %v1282
        %v1288 = vsel %vm1287, %v1282, %v1286
        %v1289 = vmul.f32 %v1267, %v1288
        %v1290 = vmul.f32 %v1269, %v1288
        %v1291 = vmul.f32 %v1271, %v1288
        %v1292 = vmul.f32 %v1273, %v1288
        %v1293 = vmul.f32 %v1275, %v1288
        %v1294 = vmul.f32 %v1277, %v1288
        %v1295 = vmul.f32 %v1279, %v1288
        %v1296 = vmul.f32 %v1281, %v1288
        %v1297 = vsub.f32 %v1258, %v1289
        %v1298 = vsub.f32 %v1259, %v1290
        %v1299 = vsub.f32 %v1260, %v1291
        %v1300 = vsub.f32 %v1261, %v1292
        %v1301 = vsub.f32 %v1262, %v1293
        %v1302 = vsub.f32 %v1263, %v1294
        %v1303 = vsub.f32 %v1264, %v1295
        %v1304 = vsub.f32 %v1265, %v1296
        %v1305 = vmul.f32 %v1297, %v1297
        %v1306 = vmul.f32 %v1298, %v1298
        %v1307 = vmul.f32 %v1299, %v1299
        %v1308 = vmul.f32 %v1300, %v1300
        %v1309 = vmul.f32 %v1301, %v1301
        %v1310 = vmul.f32 %v1302, %v1302
        %v1311 = vmul.f32 %v1303, %v1303
        %v1312 = vmul.f32 %v1304, %v1304
        %1313 = vadd.xlane.f32.xlu0 %v1305
        %v1314 = vpop.xlane.xlu0 %1313
        %1315 = vadd.xlane.f32.xlu0 %v1306
        %v1316 = vpop.xlane.xlu0 %1315
        %1317 = vadd.xlane.f32.xlu0 %v1307
        %v1318 = vpop.xlane.xlu0 %1317
        %1319 = vadd.xlane.f32.xlu0 %v1308
        %v1320 = vpop.xlane.xlu0 %1319
        %1321 = vadd.xlane.f32.xlu0 %v1309
        %v1322 = vpop.xlane.xlu0 %1321
        %1323 = vadd.xlane.f32.xlu0 %v1310
        %v1324 = vpop.xlane.xlu0 %1323
        %1325 = vadd.xlane.f32.xlu0 %v1311
        %v1326 = vpop.xlane.xlu0 %1325
        %1327 = vadd.xlane.f32.xlu0 %v1312
        %v1328 = vpop.xlane.xlu0 %1327
        %v1329 = vmul.f32 %v1314, %v1288
        %v1330 = vmul.f32 %v1316, %v1288
        %v1331 = vmul.f32 %v1318, %v1288
        %v1332 = vmul.f32 %v1320, %v1288
        %v1333 = vmul.f32 %v1322, %v1288
        %v1334 = vmul.f32 %v1324, %v1288
        %v1335 = vmul.f32 %v1326, %v1288
        %v1336 = vmul.f32 %v1328, %v1288
        %v1337 = vadd.f32 %v1329, 1e-05
        %v1338 = vadd.f32 %v1330, 1e-05
        %v1339 = vadd.f32 %v1331, 1e-05
        %v1340 = vadd.f32 %v1332, 1e-05
        %v1341 = vadd.f32 %v1333, 1e-05
        %v1342 = vadd.f32 %v1334, 1e-05
        %v1343 = vadd.f32 %v1335, 1e-05
        %v1344 = vadd.f32 %v1336, 1e-05
        %v1345 = vrsqrt.pop %v1337
        %v1346 = vmul.f32 %v1345, %v1337
        %v1347 = vmul.f32 %v1346, %v1345
        %v1348 = vmul.f32 0.5, %v1347
        %v1349 = vsub.f32 1.5, %v1348
        %v1350 = vmul.f32 %v1345, %v1349
        %vm1351 = vweird.f32 %v1337
        %vm1352 = vweird.f32 %v1345
        %vm1353 = vmor %vm1351, %vm1352
        %v1354 = vsel %vm1353, %v1345, %v1350
        %v1355 = vrsqrt.pop %v1338
        %v1356 = vmul.f32 %v1355, %v1338
        %v1357 = vmul.f32 %v1356, %v1355
        %v1358 = vmul.f32 0.5, %v1357
        %v1359 = vsub.f32 1.5, %v1358
        %v1360 = vmul.f32 %v1355, %v1359
        %vm1361 = vweird.f32 %v1338
        %vm1362 = vweird.f32 %v1355
        %vm1363 = vmor %vm1361, %vm1362
        %v1364 = vsel %vm1363, %v1355, %v1360
        %v1365 = vrsqrt.pop %v1339
        %v1366 = vmul.f32 %v1365, %v1339
        %v1367 = vmul.f32 %v1366, %v1365
        %v1368 = vmul.f32 0.5, %v1367
        %v1369 = vsub.f32 1.5, %v1368
        %v1370 = vmul.f32 %v1365, %v1369
        %vm1371 = vweird.f32 %v1339
        %vm1372 = vweird.f32 %v1365
        %vm1373 = vmor %vm1371, %vm1372
        %v1374 = vsel %vm1373, %v1365, %v1370
        %v1375 = vrsqrt.pop %v1340
        %v1376 = vmul.f32 %v1375, %v1340
        %v1377 = vmul.f32 %v1376, %v1375
        %v1378 = vmul.f32 0.5, %v1377
        %v1379 = vsub.f32 1.5, %v1378
        %v1380 = vmul.f32 %v1375, %v1379
        %vm1381 = vweird.f32 %v1340
        %vm1382 = vweird.f32 %v1375
        %vm1383 = vmor %vm1381, %vm1382
        %v1384 = vsel %vm1383, %v1375, %v1380
        %v1385 = vrsqrt.pop %v1341
        %v1386 = vmul.f32 %v1385, %v1341
        %v1387 = vmul.f32 %v1386, %v1385
        %v1388 = vmul.f32 0.5, %v1387
        %v1389 = vsub.f32 1.5, %v1388
        %v1390 = vmul.f32 %v1385, %v1389
        %vm1391 = vweird.f32 %v1341
        %vm1392 = vweird.f32 %v1385
        %vm1393 = vmor %vm1391, %vm1392
        %v1394 = vsel %vm1393, %v1385, %v1390
        %v1395 = vrsqrt.pop %v1342
        %v1396 = vmul.f32 %v1395, %v1342
        %v1397 = vmul.f32 %v1396, %v1395
        %v1398 = vmul.f32 0.5, %v1397
        %v1399 = vsub.f32 1.5, %v1398
        %v1400 = vmul.f32 %v1395, %v1399
        %vm1401 = vweird.f32 %v1342
        %vm1402 = vweird.f32 %v1395
        %vm1403 = vmor %vm1401, %vm1402
        %v1404 = vsel %vm1403, %v1395, %v1400
        %v1405 = vrsqrt.pop %v1343
        %v1406 = vmul.f32 %v1405, %v1343
        %v1407 = vmul.f32 %v1406, %v1405
        %v1408 = vmul.f32 0.5, %v1407
        %v1409 = vsub.f32 1.5, %v1408
        %v1410 = vmul.f32 %v1405, %v1409
        %vm1411 = vweird.f32 %v1343
        %vm1412 = vweird.f32 %v1405
        %vm1413 = vmor %vm1411, %vm1412
        %v1414 = vsel %vm1413, %v1405, %v1410
        %v1415 = vrsqrt.pop %v1344
        %v1416 = vmul.f32 %v1415, %v1344
        %v1417 = vmul.f32 %v1416, %v1415
        %v1418 = vmul.f32 0.5, %v1417
        %v1419 = vsub.f32 1.5, %v1418
        %v1420 = vmul.f32 %v1415, %v1419
        %vm1421 = vweird.f32 %v1344
        %vm1422 = vweird.f32 %v1415
        %vm1423 = vmor %vm1421, %vm1422
        %v1424 = vsel %vm1423, %v1415, %v1420
        %v1425 = vmul.f32 %v1297, %v1354
        %v1426 = vmul.f32 %v1298, %v1364
        %v1427 = vmul.f32 %v1299, %v1374
        %v1428 = vmul.f32 %v1300, %v1384
        %v1429 = vmul.f32 %v1301, %v1394
        %v1430 = vmul.f32 %v1302, %v1404
        %v1431 = vmul.f32 %v1303, %v1414
        %v1432 = vmul.f32 %v1304, %v1424
        %v1433 = vpack.c.bf16 %v1426, %v1425
        %v1434 = vpack.c.bf16 %v1428, %v1427
        %v1435 = vpack.c.bf16 %v1430, %v1429
        %v1436 = vpack.c.bf16 %v1432, %v1431
        %v1437 = vld [vmem:[#allocation11] sm:$0xff]
        %v1438 = vld [vmem:[#allocation11 + $0x8] sm:$0xff]
        %v1439 = vld [vmem:[#allocation11 + $0x10] sm:$0xff]
        %v1440 = vld [vmem:[#allocation11 + $0x18] sm:$0xff]
        %v1441 = vld [vmem:[#allocation11 + $0x20] sm:$0xff]
        %v1442 = vld [vmem:[#allocation11 + $0x28] sm:$0xff]
        %v1443 = vld [vmem:[#allocation11 + $0x30] sm:$0xff]
        %v1444 = vld [vmem:[#allocation11 + $0x38] sm:$0xff]
        %v1445 = vld [vmem:[#allocation11 + $0x40] sm:$0xff]
        %v1446 = vld [vmem:[#allocation11 + $0x48] sm:$0xff]
        %v1447 = vld [vmem:[#allocation11 + $0x50] sm:$0xff]
        %v1448 = vld [vmem:[#allocation11 + $0x58] sm:$0xff]
        %v1449 = vld [vmem:[#allocation11 + $0x60] sm:$0xff]
        %v1450 = vld [vmem:[#allocation11 + $0x68] sm:$0xff]
        %v1451 = vld [vmem:[#allocation11 + $0x70] sm:$0xff]
        %v1452 = vld [vmem:[#allocation11 + $0x78] sm:$0xff]
        %v1453 = vld [vmem:[%s6] sm:$0x3]
        %v1455 = vperm.slane %v1453, 0
        %v1456 = vperm.slane %v1453, 1
        %v1475 = vunpack.c.l.b16 %v1437
        %v1476 = vunpack.c.h.b16 %v1437
        %v1477 = vunpack.c.l.b16 %v1438
        %v1478 = vunpack.c.h.b16 %v1438
        %v1479 = vunpack.c.l.b16 %v1439
        %v1480 = vunpack.c.h.b16 %v1439
        %v1481 = vunpack.c.l.b16 %v1440
        %v1482 = vunpack.c.h.b16 %v1440
        %v1483 = vunpack.c.l.b16 %v1441
        %v1484 = vunpack.c.h.b16 %v1441
        %v1485 = vunpack.c.l.b16 %v1442
        %v1486 = vunpack.c.h.b16 %v1442
        %v1487 = vunpack.c.l.b16 %v1443
        %v1488 = vunpack.c.h.b16 %v1443
        %v1489 = vunpack.c.l.b16 %v1444
        %v1490 = vunpack.c.h.b16 %v1444
        %v1491 = vunpack.c.l.b16 %v1445
        %v1492 = vunpack.c.h.b16 %v1445
        %v1493 = vunpack.c.l.b16 %v1446
        %v1494 = vunpack.c.h.b16 %v1446
        %v1495 = vunpack.c.l.b16 %v1447
        %v1496 = vunpack.c.h.b16 %v1447
        %v1497 = vunpack.c.l.b16 %v1448
        %v1498 = vunpack.c.h.b16 %v1448
        %v1499 = vunpack.c.l.b16 %v1449
        %v1500 = vunpack.c.h.b16 %v1449
        %v1501 = vunpack.c.l.b16 %v1450
        %v1502 = vunpack.c.h.b16 %v1450
        %v1503 = vunpack.c.l.b16 %v1451
        %v1504 = vunpack.c.h.b16 %v1451
        %v1505 = vunpack.c.l.b16 %v1452
        %v1506 = vunpack.c.h.b16 %v1452
        %v1507 = vpack.c.b16 %v1477, %v1475
        %v1508 = vpack.c.b16 %v1478, %v1476
        %v1509 = vpack.c.b16 %v1481, %v1479
        %v1510 = vpack.c.b16 %v1482, %v1480
        %v1511 = vpack.c.b16 %v1485, %v1483
        %v1512 = vpack.c.b16 %v1486, %v1484
        %v1513 = vpack.c.b16 %v1489, %v1487
        %v1514 = vpack.c.b16 %v1490, %v1488
        %v1515 = vpack.c.b16 %v1493, %v1491
        %v1516 = vpack.c.b16 %v1494, %v1492
        %v1517 = vpack.c.b16 %v1497, %v1495
        %v1518 = vpack.c.b16 %v1498, %v1496
        %v1519 = vpack.c.b16 %v1501, %v1499
        %v1520 = vpack.c.b16 %v1502, %v1500
        %v1521 = vpack.c.b16 %v1505, %v1503
        %v1522 = vpack.c.b16 %v1506, %v1504
        %1539 = vmatpush.bf16.msra.mxu0 %v1521
        %1540 = vmatpush.bf16.msra.mxu0 %v1519
        %1541 = vmatpush.bf16.msra.mxu0 %v1517
        %1542 = vmatpush.bf16.msra.mxu0 %v1515
        %1543 = vmatpush.bf16.msra.mxu0 %v1513
        %1544 = vmatpush.bf16.msra.mxu0 %v1511
        %1545 = vmatpush.bf16.msra.mxu0 %v1509
        %1546 = vmatpush.bf16.msra.mxu0 %v1507
        %1547 = vmatmul.bf16.gmra.mxu0 %v1433
        %v1548 = vpop.f32.mrf.mxu0
        %v1549 = vadd.f32 %v1455, %v1548
        %v1550 = vpop.f32.mrf.mxu0
        %v1551 = vadd.f32 %v1455, %v1550
        %1552 = vmatmul.bf16.gmra.mxu0 %v1434
        %v1553 = vpop.f32.mrf.mxu0
        %v1554 = vadd.f32 %v1455, %v1553
        %v1555 = vpop.f32.mrf.mxu0
        %v1556 = vadd.f32 %v1455, %v1555
        %1557 = vmatmul.bf16.gmra.mxu0 %v1435
        %v1558 = vpop.f32.mrf.mxu0
        %v1559 = vadd.f32 %v1455, %v1558
        %v1560 = vpop.f32.mrf.mxu0
        %v1561 = vadd.f32 %v1455, %v1560
        %1562 = vmatmul.bf16.gmra.mxu0 %v1436
        %v1563 = vpop.f32.mrf.mxu0
        %v1564 = vadd.f32 %v1455, %v1563
        %v1565 = vpop.f32.mrf.mxu0
        %v1566 = vadd.f32 %v1455, %v1565
        %1567 = vdwg.mxu0
        %1568 = vmatpush.bf16.msra.mxu0 %v1522
        %1569 = vmatpush.bf16.msra.mxu0 %v1520
        %1570 = vmatpush.bf16.msra.mxu0 %v1518
        %1571 = vmatpush.bf16.msra.mxu0 %v1516
        %1572 = vmatpush.bf16.msra.mxu0 %v1514
        %1573 = vmatpush.bf16.msra.mxu0 %v1512
        %1574 = vmatpush.bf16.msra.mxu0 %v1510
        %1575 = vmatpush.bf16.msra.mxu0 %v1508
        %1576 = vmatmul.bf16.gmra.mxu0 %v1433
        %v1577 = vpop.f32.mrf.mxu0
        %v1578 = vadd.f32 %v1456, %v1577
        %v1579 = vpop.f32.mrf.mxu0
        %v1580 = vadd.f32 %v1456, %v1579
        %1581 = vmatmul.bf16.gmra.mxu0 %v1434
        %v1582 = vpop.f32.mrf.mxu0
        %v1583 = vadd.f32 %v1456, %v1582
        %v1584 = vpop.f32.mrf.mxu0
        %v1585 = vadd.f32 %v1456, %v1584
        %1586 = vmatmul.bf16.gmra.mxu0 %v1435
        %v1587 = vpop.f32.mrf.mxu0
        %v1588 = vadd.f32 %v1456, %v1587
        %v1589 = vpop.f32.mrf.mxu0
        %v1590 = vadd.f32 %v1456, %v1589
        %1591 = vmatmul.bf16.gmra.mxu0 %v1436
        %v1592 = vpop.f32.mrf.mxu0
        %v1593 = vadd.f32 %v1456, %v1592
        %v1594 = vpop.f32.mrf.mxu0
        %v1595 = vadd.f32 %v1456, %v1594
        %1596 = vdwg.mxu0
        %v1597 = vmul.f32 %v1549, %v1549
        %v1598 = vmul.f32 %v1578, %v1578
        %v1599 = vmul.f32 %v1551, %v1551
        %v1600 = vmul.f32 %v1580, %v1580
        %v1601 = vmul.f32 %v1554, %v1554
        %v1602 = vmul.f32 %v1583, %v1583
        %v1603 = vmul.f32 %v1556, %v1556
        %v1604 = vmul.f32 %v1585, %v1585
        %v1605 = vmul.f32 %v1559, %v1559
        %v1606 = vmul.f32 %v1588, %v1588
        %v1607 = vmul.f32 %v1561, %v1561
        %v1608 = vmul.f32 %v1590, %v1590
        %v1609 = vmul.f32 %v1564, %v1564
        %v1610 = vmul.f32 %v1593, %v1593
        %v1611 = vmul.f32 %v1566, %v1566
        %v1612 = vmul.f32 %v1595, %v1595
        %v1613 = vmul.f32 %v1549, %v1597
        %v1614 = vmul.f32 %v1578, %v1598
        %v1615 = vmul.f32 %v1551, %v1599
        %v1616 = vmul.f32 %v1580, %v1600
        %v1617 = vmul.f32 %v1554, %v1601
        %v1618 = vmul.f32 %v1583, %v1602
        %v1619 = vmul.f32 %v1556, %v1603
        %v1620 = vmul.f32 %v1585, %v1604
        %v1621 = vmul.f32 %v1559, %v1605
        %v1622 = vmul.f32 %v1588, %v1606
        %v1623 = vmul.f32 %v1561, %v1607
        %v1624 = vmul.f32 %v1590, %v1608
        %v1625 = vmul.f32 %v1564, %v1609
        %v1626 = vmul.f32 %v1593, %v1610
        %v1627 = vmul.f32 %v1566, %v1611
        %v1628 = vmul.f32 %v1595, %v1612
        %v1629 = vmul.f32 %v1613, 0.044715
        %v1630 = vmul.f32 %v1614, 0.044715
        %v1631 = vmul.f32 %v1615, 0.044715
        %v1632 = vmul.f32 %v1616, 0.044715
        %v1633 = vmul.f32 %v1617, 0.044715
        %v1634 = vmul.f32 %v1618, 0.044715
        %v1635 = vmul.f32 %v1619, 0.044715
        %v1636 = vmul.f32 %v1620, 0.044715
        %v1637 = vmul.f32 %v1621, 0.044715
        %v1638 = vmul.f32 %v1622, 0.044715
        %v1639 = vmul.f32 %v1623, 0.044715
        %v1640 = vmul.f32 %v1624, 0.044715
        %v1641 = vmul.f32 %v1625, 0.044715
        %v1642 = vmul.f32 %v1626, 0.044715
        %v1643 = vmul.f32 %v1627, 0.044715
        %v1644 = vmul.f32 %v1628, 0.044715
        %v1645 = vadd.f32 %v1549, %v1629
        %v1646 = vadd.f32 %v1578, %v1630
        %v1647 = vadd.f32 %v1551, %v1631
        %v1648 = vadd.f32 %v1580, %v1632
        %v1649 = vadd.f32 %v1554, %v1633
        %v1650 = vadd.f32 %v1583, %v1634
        %v1651 = vadd.f32 %v1556, %v1635
        %v1652 = vadd.f32 %v1585, %v1636
        %v1653 = vadd.f32 %v1559, %v1637
        %v1654 = vadd.f32 %v1588, %v1638
        %v1655 = vadd.f32 %v1561, %v1639
        %v1656 = vadd.f32 %v1590, %v1640
        %v1657 = vadd.f32 %v1564, %v1641
        %v1658 = vadd.f32 %v1593, %v1642
        %v1659 = vadd.f32 %v1566, %v1643
        %v1660 = vadd.f32 %v1595, %v1644
        %v1661 = vmul.f32 %v1645, 0.7978846
        %v1662 = vmul.f32 %v1646, 0.7978846
        %v1663 = vmul.f32 %v1647, 0.7978846
        %v1664 = vmul.f32 %v1648, 0.7978846
        %v1665 = vmul.f32 %v1649, 0.7978846
        %v1666 = vmul.f32 %v1650, 0.7978846
        %v1667 = vmul.f32 %v1651, 0.7978846
        %v1668 = vmul.f32 %v1652, 0.7978846
        %v1669 = vmul.f32 %v1653, 0.7978846
        %v1670 = vmul.f32 %v1654, 0.7978846
        %v1671 = vmul.f32 %v1655, 0.7978846
        %v1672 = vmul.f32 %v1656, 0.7978846
        %v1673 = vmul.f32 %v1657, 0.7978846
        %v1674 = vmul.f32 %v1658, 0.7978846
        %v1675 = vmul.f32 %v1659, 0.7978846
        %v1676 = vmul.f32 %v1660, 0.7978846
        %v1677 = vtanh.pop %v1661
        %v1678 = vtanh.pop %v1662
        %v1679 = vtanh.pop %v1663
        %v1680 = vtanh.pop %v1664
        %v1681 = vtanh.pop %v1665
        %v1682 = vtanh.pop %v1666
        %v1683 = vtanh.pop %v1667
        %v1684 = vtanh.pop %v1668
        %v1685 = vtanh.pop %v1669
        %v1686 = vtanh.pop %v1670
        %v1687 = vtanh.pop %v1671
        %v1688 = vtanh.pop %v1672
        %v1689 = vtanh.pop %v1673
        %v1690 = vtanh.pop %v1674
        %v1691 = vtanh.pop %v1675
        %v1692 = vtanh.pop %v1676
        %v1693 = vadd.f32 %v1677, 1.0
        %v1694 = vadd.f32 %v1678, 1.0
        %v1695 = vadd.f32 %v1679, 1.0
        %v1696 = vadd.f32 %v1680, 1.0
        %v1697 = vadd.f32 %v1681, 1.0
        %v1698 = vadd.f32 %v1682, 1.0
        %v1699 = vadd.f32 %v1683, 1.0
        %v1700 = vadd.f32 %v1684, 1.0
        %v1701 = vadd.f32 %v1685, 1.0
        %v1702 = vadd.f32 %v1686, 1.0
        %v1703 = vadd.f32 %v1687, 1.0
        %v1704 = vadd.f32 %v1688, 1.0
        %v1705 = vadd.f32 %v1689, 1.0
        %v1706 = vadd.f32 %v1690, 1.0
        %v1707 = vadd.f32 %v1691, 1.0
        %v1708 = vadd.f32 %v1692, 1.0
        %v1709 = vmul.f32 %v1693, 0.5
        %v1710 = vmul.f32 %v1694, 0.5
        %v1711 = vmul.f32 %v1695, 0.5
        %v1712 = vmul.f32 %v1696, 0.5
        %v1713 = vmul.f32 %v1697, 0.5
        %v1714 = vmul.f32 %v1698, 0.5
        %v1715 = vmul.f32 %v1699, 0.5
        %v1716 = vmul.f32 %v1700, 0.5
        %v1717 = vmul.f32 %v1701, 0.5
        %v1718 = vmul.f32 %v1702, 0.5
        %v1719 = vmul.f32 %v1703, 0.5
        %v1720 = vmul.f32 %v1704, 0.5
        %v1721 = vmul.f32 %v1705, 0.5
        %v1722 = vmul.f32 %v1706, 0.5
        %v1723 = vmul.f32 %v1707, 0.5
        %v1724 = vmul.f32 %v1708, 0.5
        %v1725 = vmul.f32 %v1549, %v1709
        %v1726 = vmul.f32 %v1578, %v1710
        %v1727 = vmul.f32 %v1551, %v1711
        %v1728 = vmul.f32 %v1580, %v1712
        %v1729 = vmul.f32 %v1554, %v1713
        %v1730 = vmul.f32 %v1583, %v1714
        %v1731 = vmul.f32 %v1556, %v1715
        %v1732 = vmul.f32 %v1585, %v1716
        %v1733 = vmul.f32 %v1559, %v1717
        %v1734 = vmul.f32 %v1588, %v1718
        %v1735 = vmul.f32 %v1561, %v1719
        %v1736 = vmul.f32 %v1590, %v1720
        %v1737 = vmul.f32 %v1564, %v1721
        %v1738 = vmul.f32 %v1593, %v1722
        %v1739 = vmul.f32 %v1566, %v1723
        %v1740 = vmul.f32 %v1595, %v1724
        %v1741 = vpack.c.bf16 %v1727, %v1725
        %v1742 = vpack.c.bf16 %v1728, %v1726
        %v1743 = vpack.c.bf16 %v1731, %v1729
        %v1744 = vpack.c.bf16 %v1732, %v1730
        %v1745 = vpack.c.bf16 %v1735, %v1733
        %v1746 = vpack.c.bf16 %v1736, %v1734
        %v1747 = vpack.c.bf16 %v1739, %v1737
        %v1748 = vpack.c.bf16 %v1740, %v1738
        %v1749 = vld [vmem:[#allocation12] sm:$0xf]
        %v1750 = vld [vmem:[#allocation12 + $0x4] sm:$0xf]
        %v1751 = vld [vmem:[#allocation12 + $0x8] sm:$0xf]
        %v1752 = vld [vmem:[#allocation12 + $0xc] sm:$0xf]
        %v1753 = vld [vmem:[#allocation12 + $0x10] sm:$0xf]
        %v1754 = vld [vmem:[#allocation12 + $0x14] sm:$0xf]
        %v1755 = vld [vmem:[#allocation12 + $0x18] sm:$0xf]
        %v1756 = vld [vmem:[#allocation12 + $0x1c] sm:$0xf]
        %v1757 = vld [vmem:[#allocation12 + $0x20] sm:$0xf]
        %v1758 = vld [vmem:[#allocation12 + $0x24] sm:$0xf]
        %v1759 = vld [vmem:[#allocation12 + $0x28] sm:$0xf]
        %v1760 = vld [vmem:[#allocation12 + $0x2c] sm:$0xf]
        %v1761 = vld [vmem:[#allocation12 + $0x30] sm:$0xf]
        %v1762 = vld [vmem:[#allocation12 + $0x34] sm:$0xf]
        %v1763 = vld [vmem:[#allocation12 + $0x38] sm:$0xf]
        %v1764 = vld [vmem:[#allocation12 + $0x3c] sm:$0xf]
        %v1765 = vld [vmem:[#allocation12 + $0x40] sm:$0xf]
        %v1766 = vld [vmem:[#allocation12 + $0x44] sm:$0xf]
        %v1767 = vld [vmem:[#allocation12 + $0x48] sm:$0xf]
        %v1768 = vld [vmem:[#allocation12 + $0x4c] sm:$0xf]
        %v1769 = vld [vmem:[#allocation12 + $0x50] sm:$0xf]
        %v1770 = vld [vmem:[#allocation12 + $0x54] sm:$0xf]
        %v1771 = vld [vmem:[#allocation12 + $0x58] sm:$0xf]
        %v1772 = vld [vmem:[#allocation12 + $0x5c] sm:$0xf]
        %v1773 = vld [vmem:[#allocation12 + $0x60] sm:$0xf]
        %v1774 = vld [vmem:[#allocation12 + $0x64] sm:$0xf]
        %v1775 = vld [vmem:[#allocation12 + $0x68] sm:$0xf]
        %v1776 = vld [vmem:[#allocation12 + $0x6c] sm:$0xf]
        %v1777 = vld [vmem:[#allocation12 + $0x70] sm:$0xf]
        %v1778 = vld [vmem:[#allocation12 + $0x74] sm:$0xf]
        %v1779 = vld [vmem:[#allocation12 + $0x78] sm:$0xf]
        %v1780 = vld [vmem:[#allocation12 + $0x7c] sm:$0xf]
        %v1781 = vld [vmem:[%s8] sm:$0x1]
        %v1783 = vperm.slane %v1781, 0
        %v1817 = vunpack.c.l.b16 %v1749
        %v1818 = vunpack.c.l.b16 %v1750
        %v1819 = vunpack.c.l.b16 %v1751
        %v1820 = vunpack.c.l.b16 %v1752
        %v1821 = vunpack.c.l.b16 %v1753
        %v1822 = vunpack.c.l.b16 %v1754
        %v1823 = vunpack.c.l.b16 %v1755
        %v1824 = vunpack.c.l.b16 %v1756
        %v1825 = vunpack.c.l.b16 %v1757
        %v1826 = vunpack.c.l.b16 %v1758
        %v1827 = vunpack.c.l.b16 %v1759
        %v1828 = vunpack.c.l.b16 %v1760
        %v1829 = vunpack.c.l.b16 %v1761
        %v1830 = vunpack.c.l.b16 %v1762
        %v1831 = vunpack.c.l.b16 %v1763
        %v1832 = vunpack.c.l.b16 %v1764
        %v1833 = vunpack.c.l.b16 %v1765
        %v1834 = vunpack.c.l.b16 %v1766
        %v1835 = vunpack.c.l.b16 %v1767
        %v1836 = vunpack.c.l.b16 %v1768
        %v1837 = vunpack.c.l.b16 %v1769
        %v1838 = vunpack.c.l.b16 %v1770
        %v1839 = vunpack.c.l.b16 %v1771
        %v1840 = vunpack.c.l.b16 %v1772
        %v1841 = vunpack.c.l.b16 %v1773
        %v1842 = vunpack.c.l.b16 %v1774
        %v1843 = vunpack.c.l.b16 %v1775
        %v1844 = vunpack.c.l.b16 %v1776
        %v1845 = vunpack.c.l.b16 %v1777
        %v1846 = vunpack.c.l.b16 %v1778
        %v1847 = vunpack.c.l.b16 %v1779
        %v1848 = vunpack.c.l.b16 %v1780
        %v1849 = vpack.c.b16 %v1818, %v1817
        %v1850 = vpack.c.b16 %v1820, %v1819
        %v1851 = vpack.c.b16 %v1822, %v1821
        %v1852 = vpack.c.b16 %v1824, %v1823
        %v1853 = vpack.c.b16 %v1826, %v1825
        %v1854 = vpack.c.b16 %v1828, %v1827
        %v1855 = vpack.c.b16 %v1830, %v1829
        %v1856 = vpack.c.b16 %v1832, %v1831
        %v1857 = vpack.c.b16 %v1834, %v1833
        %v1858 = vpack.c.b16 %v1836, %v1835
        %v1859 = vpack.c.b16 %v1838, %v1837
        %v1860 = vpack.c.b16 %v1840, %v1839
        %v1861 = vpack.c.b16 %v1842, %v1841
        %v1862 = vpack.c.b16 %v1844, %v1843
        %v1863 = vpack.c.b16 %v1846, %v1845
        %v1864 = vpack.c.b16 %v1848, %v1847
        %1881 = vmatpush.bf16.msra.mxu0 %v1856
        %1882 = vmatpush.bf16.msra.mxu0 %v1855
        %1883 = vmatpush.bf16.msra.mxu0 %v1854
        %1884 = vmatpush.bf16.msra.mxu0 %v1853
        %1885 = vmatpush.bf16.msra.mxu0 %v1852
        %1886 = vmatpush.bf16.msra.mxu0 %v1851
        %1887 = vmatpush.bf16.msra.mxu0 %v1850
        %1888 = vmatpush.bf16.msra.mxu0 %v1849
        %1889 = vmatmul.bf16.gmra.mxu0 %v1741
        %v1890 = vpop.f32.mrf.mxu0
        %v1891 = vpop.f32.mrf.mxu0
        %v1892 = vadd.f32 %v1783, %v1891
        %1893 = vmatmul.bf16.gmra.mxu0 %v1743
        %v1894 = vpop.f32.mrf.mxu0
        %v1895 = vpop.f32.mrf.mxu0
        %v1896 = vadd.f32 %v1783, %v1895
        %1897 = vmatmul.bf16.gmra.mxu0 %v1745
        %v1898 = vpop.f32.mrf.mxu0
        %v1899 = vpop.f32.mrf.mxu0
        %v1900 = vadd.f32 %v1783, %v1899
        %1901 = vmatmul.bf16.gmra.mxu0 %v1747
        %v1902 = vpop.f32.mrf.mxu0
        %v1903 = vpop.f32.mrf.mxu0
        %v1904 = vadd.f32 %v1783, %v1903
        %1905 = vdwg.mxu0
        %1906 = vmatpush.bf16.msra.mxu0 %v1864
        %1907 = vmatpush.bf16.msra.mxu0 %v1863
        %1908 = vmatpush.bf16.msra.mxu0 %v1862
        %1909 = vmatpush.bf16.msra.mxu0 %v1861
        %1910 = vmatpush.bf16.msra.mxu0 %v1860
        %1911 = vmatpush.bf16.msra.mxu0 %v1859
        %1912 = vmatpush.bf16.msra.mxu0 %v1858
        %1913 = vmatpush.bf16.msra.mxu0 %v1857
        %1914 = vmatmul.bf16.gmra.mxu0 %v1742
        %v1915 = vpop.f32.mrf.mxu0
        %v1916 = vpop.f32.mrf.mxu0
        %v1917 = vadd.f32 %v1892, %v1916
        %1918 = vmatmul.bf16.gmra.mxu0 %v1744
        %v1919 = vpop.f32.mrf.mxu0
        %v1920 = vpop.f32.mrf.mxu0
        %v1921 = vadd.f32 %v1896, %v1920
        %1922 = vmatmul.bf16.gmra.mxu0 %v1746
        %v1923 = vpop.f32.mrf.mxu0
        %v1924 = vpop.f32.mrf.mxu0
        %v1925 = vadd.f32 %v1900, %v1924
        %1926 = vmatmul.bf16.gmra.mxu0 %v1748
        %v1927 = vpop.f32.mrf.mxu0
        %v1928 = vpop.f32.mrf.mxu0
        %v1929 = vadd.f32 %v1904, %v1928
        %1930 = vdwg.mxu0
        %v1931 = vadd.f32 %v1426, %v1917
        %v1932 = vadd.f32 %v1428, %v1921
        %v1933 = vadd.f32 %v1430, %v1925
        %v1934 = vadd.f32 %v1432, %v1929
        %1935 = vadd.xlane.f32.xlu0 %v1931
        %v1936 = vpop.xlane.xlu0 %1935
        %1937 = vadd.xlane.f32.xlu0 %v1932
        %v1938 = vpop.xlane.xlu0 %1937
        %1939 = vadd.xlane.f32.xlu0 %v1933
        %v1940 = vpop.xlane.xlu0 %1939
        %1941 = vadd.xlane.f32.xlu0 %v1934
        %v1942 = vpop.xlane.xlu0 %1941
        %v1943 = vmul.f32 %v1936, %v1288
        %v1944 = vmul.f32 %v1938, %v1288
        %v1945 = vmul.f32 %v1940, %v1288
        %v1946 = vmul.f32 %v1942, %v1288
        %v1947 = vsub.f32 %v1931, %v1943
        %v1948 = vsub.f32 %v1932, %v1944
        %v1949 = vsub.f32 %v1933, %v1945
        %v1950 = vsub.f32 %v1934, %v1946
        %v1951 = vmul.f32 %v1947, %v1947
        %v1952 = vmul.f32 %v1948, %v1948
        %v1953 = vmul.f32 %v1949, %v1949
        %v1954 = vmul.f32 %v1950, %v1950
        %1955 = vadd.xlane.f32.xlu0 %v1951
        %v1956 = vpop.xlane.xlu0 %1955
        %1957 = vadd.xlane.f32.xlu0 %v1952
        %v1958 = vpop.xlane.xlu0 %1957
        %1959 = vadd.xlane.f32.xlu0 %v1953
        %v1960 = vpop.xlane.xlu0 %1959
        %1961 = vadd.xlane.f32.xlu0 %v1954
        %v1962 = vpop.xlane.xlu0 %1961
        %v1963 = vmul.f32 %v1956, %v1288
        %v1964 = vmul.f32 %v1958, %v1288
        %v1965 = vmul.f32 %v1960, %v1288
        %v1966 = vmul.f32 %v1962, %v1288
        %v1967 = vadd.f32 %v1963, 1e-05
        %v1968 = vadd.f32 %v1964, 1e-05
        %v1969 = vadd.f32 %v1965, 1e-05
        %v1970 = vadd.f32 %v1966, 1e-05
        %v1971 = vrsqrt.pop %v1967
        %v1972 = vmul.f32 %v1971, %v1967
        %v1973 = vmul.f32 %v1972, %v1971
        %v1974 = vmul.f32 0.5, %v1973
        %v1975 = vsub.f32 1.5, %v1974
        %v1976 = vmul.f32 %v1971, %v1975
        %vm1977 = vweird.f32 %v1967
        %vm1978 = vweird.f32 %v1971
        %vm1979 = vmor %vm1977, %vm1978
        %v1980 = vsel %vm1979, %v1971, %v1976
        %v1981 = vrsqrt.pop %v1968
        %v1982 = vmul.f32 %v1981, %v1968
        %v1983 = vmul.f32 %v1982, %v1981
        %v1984 = vmul.f32 0.5, %v1983
        %v1985 = vsub.f32 1.5, %v1984
        %v1986 = vmul.f32 %v1981, %v1985
        %vm1987 = vweird.f32 %v1968
        %vm1988 = vweird.f32 %v1981
        %vm1989 = vmor %vm1987, %vm1988
        %v1990 = vsel %vm1989, %v1981, %v1986
        %v1991 = vrsqrt.pop %v1969
        %v1992 = vmul.f32 %v1991, %v1969
        %v1993 = vmul.f32 %v1992, %v1991
        %v1994 = vmul.f32 0.5, %v1993
        %v1995 = vsub.f32 1.5, %v1994
        %v1996 = vmul.f32 %v1991, %v1995
        %vm1997 = vweird.f32 %v1969
        %vm1998 = vweird.f32 %v1991
        %vm1999 = vmor %vm1997, %vm1998
        %v2000 = vsel %vm1999, %v1991, %v1996
        %v2001 = vrsqrt.pop %v1970
        %v2002 = vmul.f32 %v2001, %v1970
        %v2003 = vmul.f32 %v2002, %v2001
        %v2004 = vmul.f32 0.5, %v2003
        %v2005 = vsub.f32 1.5, %v2004
        %v2006 = vmul.f32 %v2001, %v2005
        %vm2007 = vweird.f32 %v1970
        %vm2008 = vweird.f32 %v2001
        %vm2009 = vmor %vm2007, %vm2008
        %v2010 = vsel %vm2009, %v2001, %v2006
        %v2011 = vmul.f32 %v1947, %v1980
        %v2012 = vmul.f32 %v1948, %v1990
        %v2013 = vmul.f32 %v1949, %v2000
        %v2014 = vmul.f32 %v1950, %v2010
        %v2015 = vpack.c.bf16 %v2012, %v2011
        %v2016 = vpack.c.bf16 %v2014, %v2013
        %v2017 = vld [vmem:[#allocation14] sm:$0xf]
        %v2018 = vld [vmem:[#allocation14 + $0x4] sm:$0xf]
        %v2019 = vld [vmem:[#allocation14 + $0x8] sm:$0xf]
        %v2020 = vld [vmem:[#allocation14 + $0xc] sm:$0xf]
        %v2021 = vld [vmem:[#allocation14 + $0x10] sm:$0xf]
        %v2022 = vld [vmem:[#allocation14 + $0x14] sm:$0xf]
        %v2023 = vld [vmem:[#allocation14 + $0x18] sm:$0xf]
        %v2024 = vld [vmem:[#allocation14 + $0x1c] sm:$0xf]
        %v2025 = vld [vmem:[#allocation14 + $0x20] sm:$0xf]
        %v2026 = vld [vmem:[#allocation14 + $0x24] sm:$0xf]
        %v2027 = vld [vmem:[#allocation14 + $0x28] sm:$0xf]
        %v2028 = vld [vmem:[#allocation14 + $0x2c] sm:$0xf]
        %v2029 = vld [vmem:[#allocation14 + $0x30] sm:$0xf]
        %v2030 = vld [vmem:[#allocation14 + $0x34] sm:$0xf]
        %v2031 = vld [vmem:[#allocation14 + $0x38] sm:$0xf]
        %v2032 = vld [vmem:[#allocation14 + $0x3c] sm:$0xf]
        %v2033 = vld [vmem:[%s10] sm:$0x1]
        %v2035 = vperm.slane %v2033, 0
        %v2053 = vunpack.c.l.b16 %v2017
        %v2054 = vunpack.c.l.b16 %v2018
        %v2055 = vunpack.c.l.b16 %v2019
        %v2056 = vunpack.c.l.b16 %v2020
        %v2057 = vunpack.c.l.b16 %v2021
        %v2058 = vunpack.c.l.b16 %v2022
        %v2059 = vunpack.c.l.b16 %v2023
        %v2060 = vunpack.c.l.b16 %v2024
        %v2061 = vunpack.c.l.b16 %v2025
        %v2062 = vunpack.c.l.b16 %v2026
        %v2063 = vunpack.c.l.b16 %v2027
        %v2064 = vunpack.c.l.b16 %v2028
        %v2065 = vunpack.c.l.b16 %v2029
        %v2066 = vunpack.c.l.b16 %v2030
        %v2067 = vunpack.c.l.b16 %v2031
        %v2068 = vunpack.c.l.b16 %v2032
        %v2069 = vpack.c.b16 %v2054, %v2053
        %v2070 = vpack.c.b16 %v2056, %v2055
        %v2071 = vpack.c.b16 %v2058, %v2057
        %v2072 = vpack.c.b16 %v2060, %v2059
        %v2073 = vpack.c.b16 %v2062, %v2061
        %v2074 = vpack.c.b16 %v2064, %v2063
        %v2075 = vpack.c.b16 %v2066, %v2065
        %v2076 = vpack.c.b16 %v2068, %v2067
        %2085 = vmatpush.bf16.msra.mxu0 %v2076
        %2086 = vmatpush.bf16.msra.mxu0 %v2075
        %2087 = vmatpush.bf16.msra.mxu0 %v2074
        %2088 = vmatpush.bf16.msra.mxu0 %v2073
        %2089 = vmatpush.bf16.msra.mxu0 %v2072
        %2090 = vmatpush.bf16.msra.mxu0 %v2071
        %2091 = vmatpush.bf16.msra.mxu0 %v2070
        %2092 = vmatpush.bf16.msra.mxu0 %v2069
        %2093 = vmatmul.bf16.gmra.mxu0 %v2015
        %v2094 = vpop.f32.mrf.mxu0
        %v2095 = vadd.f32 %v2035, %v2094
        %v2096 = vpop.f32.mrf.mxu0
        %v2097 = vadd.f32 %v2035, %v2096
        %2098 = vmatmul.bf16.gmra.mxu0 %v2016
        %v2099 = vpop.f32.mrf.mxu0
        %v2100 = vadd.f32 %v2035, %v2099
        %v2101 = vpop.f32.mrf.mxu0
        %v2102 = vadd.f32 %v2035, %v2101
        %2103 = vdwg.mxu0
        %2104 = vst [vmem:[%s527] sm:$0xff] %v2095
        %2105 = vst [vmem:[%s527 + $0x8] sm:$0xff] %v2097
        %2106 = vst [vmem:[%s527 + $0x10] sm:$0xff] %v2100
        %2107 = vst [vmem:[%s527 + $0x18] sm:$0xff] %v2102
        %s2108 = sand.u32 %s282, 1
        %s2109 = scalar_lea.sflag [#allocation5], %s2108
        %s2110 = sand.u32 %s282, 1
        %s2111 = smul.addr %s2110, 32
        %s2112 = scalar_lea.vmem [#allocation15], %s2111
        // Predicated region
        $region93: #{tpu_custom_call.1} parent=63 // pred_check
          %p2113 = pneg %p292
        $region94: #{tpu_custom_call.1} parent=63 // pred_check_branch
          %2115 = sbr.rel (%p2113) target = $region96
        $region95: #{tpu_custom_call.1} parent=63 // pred_region
          %2117 = vsyncadd %s2109, 0
          %s2118 = smul.addr %s33, 4
          %s2119 = smul.addr %s2118, 8
          %s2120 = scalar_lea.hbm %s11, %s2119
          %s2121 = sshll.u32 %s2112, 4
          %s2122 = int_to_ptr.vmem [resolvable:$true] %s2121
          %s2123 = sshll.u32 %s2120, 4
          %s2124 = int_to_ptr.hbm [resolvable:$true] %s2123
          %2129 = dma.vmem_to_hbm [thread:$0]  %s2122, 512, %s2124, %s2109, 128, 128, 8
        $region96: #{tpu_custom_call.1} parent=63 // pred_fallthru
          _
      $region64: #{tpu_custom_call.1} parent=5 // pred_fallthru
        _
      %p2130 = scmp.le.s32.totalorder 2, %s28
      // Predicated region
      $region97: #{tpu_custom_call.1} parent=5 // pred_check
        %p2131 = pneg %p2130
      $region98: #{tpu_custom_call.1} parent=5 // pred_check_branch
        %2133 = sbr.rel (%p2131) target = $region100
      $region99: #{tpu_custom_call.1} parent=5 // pred_region
        %s2134 = ssub.s32 %s28, 2
        // Predicated region
        $region101: #{tpu_custom_call.1} parent=99 // pred_check
          %p2135 = pneg %p298
        $region102: #{tpu_custom_call.1} parent=99 // pred_check_branch
          %2137 = sbr.rel (%p2135) target = $region104
        $region103: #{tpu_custom_call.1} parent=99 // pred_region
          %s2138 = sand.u32 %s283, 1
          %s2139 = scalar_lea.sflag [#allocation5], %s2138
          %s2140 = sand.u32 %s283, 1
          %s2141 = smul.addr %s2140, 32
          %s2142 = scalar_lea.vmem [#allocation15], %s2141
          %2144 = dma.done %s2139, 512
        $region104: #{tpu_custom_call.1} parent=99 // pred_fallthru
          _
      $region100: #{tpu_custom_call.1} parent=5 // pred_fallthru
        _
    $region6: #{tpu_custom_call.1} parent=1 // loop_footer
      %s32 = sadd.s32 1, %s28
    $region7: #{tpu_custom_call.1} parent=1 // loop_footer_branch
      %27 = sbr.rel target = $region3
    $region8: #{tpu_custom_call.1} parent=1 // loop_exit
      _
    %2145 = vsyncpa [#allocation4], 1
    %s2146 = scalar_lea.sflag [#allocation4], 1
    %2147 = vsyncpa %s2146, 1
    %2148 = vsyncpa [#allocation7], 1
    %s2149 = scalar_lea.sflag [#allocation7], 1
    %2150 = vsyncpa %s2149, 1
    %2151 = vsyncpa [#allocation10], 1
    %2152 = vsyncpa [#allocation13], 1
    %2153 = vsyncpa [#allocation5], 1
    %s2154 = scalar_lea.sflag [#allocation5], 1
    %2155 = vsyncpa %s2154, 1

</llo_original>
